<compile_context>
chip_gen: v6e
topology: v6e:2x2x1
jax: 0.10.0
libtpu: 0.0.40
codegen_flags: <defaults>
</compile_context>

<pallas_src>
import math
import functools

import jax
import jax.numpy as jnp
from jax.experimental import pallas as pl
from jax.experimental.pallas import tpu as pltpu


def make_lstm_head_kernel(num_layers: int, hidden_size: int, T: int, B_pad: int):
    """Stacked LSTM over time + MLP head, single kernel invocation."""
    H = hidden_size
    L = num_layers

    def kernel(*refs):
        # refs: x2d, (wih, whh, b) * L, fc1_w, fc1_b, fc2_w, fc2_b, out, seq_scratch
        x_ref = refs[0]                              # (T*B_pad, input_size)
        layer_refs = refs[1:1 + 3 * L]
        w1_ref, b1_ref, w2_ref, b2_ref = refs[1 + 3 * L:5 + 3 * L]
        out_ref = refs[5 + 3 * L]                    # (L*B_pad, C)
        seq_ref = refs[6 + 3 * L]                    # scratch (T*B_pad, H)

        hn_parts = []
        for l in range(L):
            wih = layer_refs[3 * l][...]             # (in_dim, 4H), gate order i,f,o,g
            whh = layer_refs[3 * l + 1][...]         # (H, 4H)
            b = layer_refs[3 * l + 2][...]           # (1, 4H)

            # Layer input: raw x for layer 0, previous layer's full output
            # sequence (written to scratch last iteration) otherwise.
            inp_seq = x_ref[...] if l == 0 else seq_ref[...]

            # Hoisted, fused input projection: one (T*Bp, in) @ (in, 4H) matmul
            # for all time steps and all four gates; bias added once.
            x_proj = jnp.dot(inp_seq, wih,
                             preferred_element_type=jnp.float32) + b

            h = jnp.zeros((B_pad, H), jnp.float32)
            c = jnp.zeros((B_pad, H), jnp.float32)
            last_layer = (l == L - 1)

            for t in range(T):                       # fully unrolled (T static)
                pre = (x_proj[t * B_pad:(t + 1) * B_pad, :]
                       + jnp.dot(h, whh, preferred_element_type=jnp.float32))
                # gate order (i, f, o, g): one contiguous sigmoid, one tanh
                ifo = jax.nn.sigmoid(pre[:, :3 * H])
                g_g = jnp.tanh(pre[:, 3 * H:])
                i_g = ifo[:, :H]
                f_g = ifo[:, H:2 * H]
                o_g = ifo[:, 2 * H:]
                c = f_g * c + i_g * g_g
                h = o_g * jnp.tanh(c)
                if not last_layer:
                    # tile-aligned static-slice store (B_pad multiple of 8)
                    seq_ref[t * B_pad:(t + 1) * B_pad, :] = h
            hn_parts.append(h)                       # final hidden of layer l

        # hn.view(-1, hidden_size)
        hn = jnp.concatenate(hn_parts, axis=0)       # (L*B_pad, H)

        # ReLU -> dropout(identity, eval) -> fc1 -> ReLU -> dropout -> fc2 -> sigmoid
        z = jnp.maximum(hn, 0.0)
        z = jnp.dot(z, w1_ref[...], preferred_element_type=jnp.float32) + b1_ref[...]
        z = jnp.maximum(z, 0.0)
        z = jnp.dot(z, w2_ref[...], preferred_element_type=jnp.float32) + b2_ref[...]
        out_ref[...] = jax.nn.sigmoid(z)             # C=4 -> masked store, negligible

    return kernel


def init_params(key, input_size, hidden_size, num_layers, num_classes):
    """PyTorch-style uniform init, pre-laid-out for the fused kernel."""
    H = hidden_size
    params = {}
    keys = jax.random.split(key, 4 * num_layers + 4)
    idx = 0
    k_lstm = 1.0 / math.sqrt(H)
    gate_perm = jnp.array([0, 1, 3, 2])  # PyTorch (i,f,g,o) -> fused (i,f,o,g)

    for l in range(num_layers):
        in_dim = input_size if l == 0 else H
        w_ih = jax.random.uniform(keys[idx], (4 * H, in_dim), jnp.float32,
                                  -k_lstm, k_lstm); idx += 1
        w_hh = jax.random.uniform(keys[idx], (4 * H, H), jnp.float32,
                                  -k_lstm, k_lstm); idx += 1
        b_ih = jax.random.uniform(keys[idx], (4 * H,), jnp.float32,
                                  -k_lstm, k_lstm); idx += 1
        b_hh = jax.random.uniform(keys[idx], (4 * H,), jnp.float32,
                                  -k_lstm, k_lstm); idx += 1
        # (4H, in) -> gate-major (4, H, in) -> reorder -> right-multiply (in, 4H)
        w_ih4 = w_ih.reshape(4, H, in_dim)[gate_perm]
        w_hh4 = w_hh.reshape(4, H, H)[gate_perm]
        params[f"lstm_wih_{l}"] = jnp.transpose(w_ih4, (2, 0, 1)).reshape(in_dim, 4 * H)
        params[f"lstm_whh_{l}"] = jnp.transpose(w_hh4, (2, 0, 1)).reshape(H, 4 * H)
        b4 = (b_ih + b_hh).reshape(4, H)[gate_perm]
        params[f"lstm_b_{l}"] = b4.reshape(1, 4 * H)

    k1 = 1.0 / math.sqrt(H)
    fc1_w = jax.random.uniform(keys[idx], (128, H), jnp.float32, -k1, k1); idx += 1
    fc1_b = jax.random.uniform(keys[idx], (128,), jnp.float32, -k1, k1); idx += 1
    k2 = 1.0 / math.sqrt(128)
    fc2_w = jax.random.uniform(keys[idx], (num_classes, 128), jnp.float32,
                               -k2, k2); idx += 1
    fc2_b = jax.random.uniform(keys[idx], (num_classes,), jnp.float32,
                               -k2, k2); idx += 1
    params["fc1_w"] = fc1_w.T                        # (H, 128)
    params["fc1_b"] = fc1_b.reshape(1, 128)
    params["fc2_w"] = fc2_w.T                        # (128, C)
    params["fc2_b"] = fc2_b.reshape(1, num_classes)
    return params


@functools.partial(jax.jit, static_argnames=("hidden_size", "num_layers",
                                             "num_classes"))
def lstm_forward(x, params, *, hidden_size, num_layers, num_classes):
    # x: (B, T, input_size) batch_first, as in PyTorch
    B, T, in_dim = x.shape
    B_pad = max(8, ((B + 7) // 8) * 8)               # sublane-aligned batch

    xt = jnp.transpose(x, (1, 0, 2))                 # time-major (T, B, in)
    if B_pad != B:
        xt = jnp.pad(xt, ((0, 0), (0, B_pad - B), (0, 0)))
    x2d = xt.reshape(T * B_pad, in_dim)              # 2D slab for the kernel

    inputs = [x2d]
    for l in range(num_layers):
        inputs += [params[f"lstm_wih_{l}"], params[f"lstm_whh_{l}"],
                   params[f"lstm_b_{l}"]]
    inputs += [params["fc1_w"], params["fc1_b"], params["fc2_w"], params["fc2_b"]]

    vmem = pl.BlockSpec(memory_space=pltpu.MemorySpace.VMEM)
    out_pad = pl.pallas_call(
        make_lstm_head_kernel(num_layers, hidden_size, T, B_pad),
        out_shape=jax.ShapeDtypeStruct((num_layers * B_pad, num_classes),
                                       jnp.float32),
        in_specs=[vmem] * len(inputs),
        out_specs=vmem,
        scratch_shapes=[pltpu.VMEM((T * B_pad, hidden_size), jnp.float32)],
        compiler_params=pltpu.CompilerParams(vmem_limit_bytes=32 * 1024 * 1024),
    )(*inputs)

    # (L*B_pad, C) -> drop the padded batch rows -> (L*B, C), matching
    # hn.view(-1, H) row order (layer-major, then batch).
    out = out_pad.reshape(num_layers, B_pad, num_classes)[:, :B, :]
    return out.reshape(num_layers * B, num_classes)


if __name__ == "__main__":
    batch, seq_len = 2, 8
    input_size, hidden_size, num_classes, num_layers = 16, 32, 4, 2

    key = jax.random.PRNGKey(0)
    kx, kp = jax.random.split(key)
    x = jax.random.normal(kx, (batch, seq_len, input_size), jnp.float32)
    params = init_params(kp, input_size, hidden_size, num_layers, num_classes)

    out = lstm_forward(x, params, hidden_size=hidden_size,
                       num_layers=num_layers, num_classes=num_classes)
    out = jax.block_until_ready(out)

    assert out.shape == (num_layers * batch, num_classes), out.shape
    assert bool(jnp.all(jnp.isfinite(out)))
    assert bool(jnp.all((out >= 0.0) & (out <= 1.0)))  # sigmoid output range
    print("KERNEL_OK")
</pallas_src>

<mosaic_0001>
module attributes {stable_mosaic.version = 11 : i64} {
  func.func @kernel(%arg0: memref<64x16xf32, #tpu.memory_space<vmem>>, %arg1: memref<16x128xf32, #tpu.memory_space<vmem>>, %arg2: memref<32x128xf32, #tpu.memory_space<vmem>>, %arg3: memref<1x128xf32, #tpu.memory_space<vmem>>, %arg4: memref<32x128xf32, #tpu.memory_space<vmem>>, %arg5: memref<32x128xf32, #tpu.memory_space<vmem>>, %arg6: memref<1x128xf32, #tpu.memory_space<vmem>>, %arg7: memref<32x128xf32, #tpu.memory_space<vmem>>, %arg8: memref<1x128xf32, #tpu.memory_space<vmem>>, %arg9: memref<128x4xf32, #tpu.memory_space<vmem>>, %arg10: memref<1x4xf32, #tpu.memory_space<vmem>>, %arg11: memref<16x4xf32, #tpu.memory_space<vmem>>, %arg12: memref<64x32xf32, #tpu.memory_space<vmem>>) attributes {dimension_semantics = [], scalar_prefetch = 0 : i64, scratch_operands = 1 : i64, tpu.core_type = #tpu.core_type<tc>} {
    %c0 = arith.constant 0 : index
    %c0_0 = arith.constant 0 : index
    %0 = vector.load %arg1[%c0, %c0_0] : memref<16x128xf32, #tpu.memory_space<vmem>>, vector<16x128xf32>
    %c0_1 = arith.constant 0 : index
    %c0_2 = arith.constant 0 : index
    %1 = vector.load %arg2[%c0_1, %c0_2] : memref<32x128xf32, #tpu.memory_space<vmem>>, vector<32x128xf32>
    %c0_3 = arith.constant 0 : index
    %c0_4 = arith.constant 0 : index
    %2 = vector.load %arg3[%c0_3, %c0_4] : memref<1x128xf32, #tpu.memory_space<vmem>>, vector<1x128xf32>
    %c0_5 = arith.constant 0 : index
    %c0_6 = arith.constant 0 : index
    %3 = vector.load %arg0[%c0_5, %c0_6] : memref<64x16xf32, #tpu.memory_space<vmem>>, vector<64x16xf32>
    %cst = arith.constant dense<0.000000e+00> : vector<64x128xf32>
    %4 = tpu.matmul %3, %0, %cst {dimension_numbers = #tpu.dot_dimension_numbers<[1], [0], [0], [1], [0, 0, 1, 1], [], []>} : vector<64x16xf32>, vector<16x128xf32>, vector<64x128xf32> -> vector<64x128xf32>
    %5 = vector.broadcast %2 : vector<1x128xf32> to vector<64x128xf32>
    %6 = arith.addf %4, %5 : vector<64x128xf32>
    %cst_7 = arith.constant 0.000000e+00 : f32
    %7 = vector.broadcast %cst_7 : f32 to vector<8x32xf32>
    %cst_8 = arith.constant 0.000000e+00 : f32
    %8 = vector.broadcast %cst_8 : f32 to vector<8x32xf32>
    %9 = vector.extract_strided_slice %6 {offsets = [0, 0], sizes = [8, 128], strides = [1, 1]} : vector<64x128xf32> to vector<8x128xf32>
    %cst_9 = arith.constant dense<0.000000e+00> : vector<8x128xf32>
    %10 = tpu.matmul %7, %1, %cst_9 {dimension_numbers = #tpu.dot_dimension_numbers<[1], [0], [0], [1], [0, 0, 1, 1], [], []>} : vector<8x32xf32>, vector<32x128xf32>, vector<8x128xf32> -> vector<8x128xf32>
    %11 = arith.addf %9, %10 : vector<8x128xf32>
    %12 = vector.extract_strided_slice %11 {offsets = [0, 0], sizes = [8, 96], strides = [1, 1]} : vector<8x128xf32> to vector<8x96xf32>
    %13 = arith.negf %12 : vector<8x96xf32>
    %14 = math.exp %13 : vector<8x96xf32>
    %cst_10 = arith.constant 1.000000e+00 : f32
    %15 = vector.broadcast %cst_10 : f32 to vector<8x96xf32>
    %16 = arith.addf %15, %14 : vector<8x96xf32>
    %17 = arith.divf %15, %16 : vector<8x96xf32>
    %18 = vector.extract_strided_slice %11 {offsets = [0, 96], sizes = [8, 32], strides = [1, 1]} : vector<8x128xf32> to vector<8x32xf32>
    %19 = math.tanh %18 : vector<8x32xf32>
    %20 = vector.extract_strided_slice %17 {offsets = [0, 0], sizes = [8, 32], strides = [1, 1]} : vector<8x96xf32> to vector<8x32xf32>
    %21 = vector.extract_strided_slice %17 {offsets = [0, 32], sizes = [8, 32], strides = [1, 1]} : vector<8x96xf32> to vector<8x32xf32>
    %22 = vector.extract_strided_slice %17 {offsets = [0, 64], sizes = [8, 32], strides = [1, 1]} : vector<8x96xf32> to vector<8x32xf32>
    %23 = arith.mulf %21, %8 : vector<8x32xf32>
    %24 = arith.mulf %20, %19 : vector<8x32xf32>
    %25 = arith.addf %23, %24 : vector<8x32xf32>
    %26 = math.tanh %25 : vector<8x32xf32>
    %27 = arith.mulf %22, %26 : vector<8x32xf32>
    %c0_11 = arith.constant 0 : index
    %c0_12 = arith.constant 0 : index
    %28 = vector.load %arg12[%c0_11, %c0_12] : memref<64x32xf32, #tpu.memory_space<vmem>>, vector<8x32xf32>
    tpu.vector_store %arg12[%c0_11, %c0_12], %27 {strides = array<i32>} : memref<64x32xf32, #tpu.memory_space<vmem>>, vector<8x32xf32>,
    %29 = vector.extract_strided_slice %6 {offsets = [8, 0], sizes = [8, 128], strides = [1, 1]} : vector<64x128xf32> to vector<8x128xf32>
    %cst_13 = arith.constant dense<0.000000e+00> : vector<8x128xf32>
    %30 = tpu.matmul %27, %1, %cst_13 {dimension_numbers = #tpu.dot_dimension_numbers<[1], [0], [0], [1], [0, 0, 1, 1], [], []>} : vector<8x32xf32>, vector<32x128xf32>, vector<8x128xf32> -> vector<8x128xf32>
    %31 = arith.addf %29, %30 : vector<8x128xf32>
    %32 = vector.extract_strided_slice %31 {offsets = [0, 0], sizes = [8, 96], strides = [1, 1]} : vector<8x128xf32> to vector<8x96xf32>
    %33 = arith.negf %32 : vector<8x96xf32>
    %34 = math.exp %33 : vector<8x96xf32>
    %cst_14 = arith.constant 1.000000e+00 : f32
    %35 = vector.broadcast %cst_14 : f32 to vector<8x96xf32>
    %36 = arith.addf %35, %34 : vector<8x96xf32>
    %37 = arith.divf %35, %36 : vector<8x96xf32>
    %38 = vector.extract_strided_slice %31 {offsets = [0, 96], sizes = [8, 32], strides = [1, 1]} : vector<8x128xf32> to vector<8x32xf32>
    %39 = math.tanh %38 : vector<8x32xf32>
    %40 = vector.extract_strided_slice %37 {offsets = [0, 0], sizes = [8, 32], strides = [1, 1]} : vector<8x96xf32> to vector<8x32xf32>
    %41 = vector.extract_strided_slice %37 {offsets = [0, 32], sizes = [8, 32], strides = [1, 1]} : vector<8x96xf32> to vector<8x32xf32>
    %42 = vector.extract_strided_slice %37 {offsets = [0, 64], sizes = [8, 32], strides = [1, 1]} : vector<8x96xf32> to vector<8x32xf32>
    %43 = arith.mulf %41, %25 : vector<8x32xf32>
    %44 = arith.mulf %40, %39 : vector<8x32xf32>
    %45 = arith.addf %43, %44 : vector<8x32xf32>
    %46 = math.tanh %45 : vector<8x32xf32>
    %47 = arith.mulf %42, %46 : vector<8x32xf32>
    %c8 = arith.constant 8 : index
    %c0_15 = arith.constant 0 : index
    %48 = vector.load %arg12[%c8, %c0_15] : memref<64x32xf32, #tpu.memory_space<vmem>>, vector<8x32xf32>
    tpu.vector_store %arg12[%c8, %c0_15], %47 {strides = array<i32>} : memref<64x32xf32, #tpu.memory_space<vmem>>, vector<8x32xf32>,
    %49 = vector.extract_strided_slice %6 {offsets = [16, 0], sizes = [8, 128], strides = [1, 1]} : vector<64x128xf32> to vector<8x128xf32>
    %cst_16 = arith.constant dense<0.000000e+00> : vector<8x128xf32>
    %50 = tpu.matmul %47, %1, %cst_16 {dimension_numbers = #tpu.dot_dimension_numbers<[1], [0], [0], [1], [0, 0, 1, 1], [], []>} : vector<8x32xf32>, vector<32x128xf32>, vector<8x128xf32> -> vector<8x128xf32>
    %51 = arith.addf %49, %50 : vector<8x128xf32>
    %52 = vector.extract_strided_slice %51 {offsets = [0, 0], sizes = [8, 96], strides = [1, 1]} : vector<8x128xf32> to vector<8x96xf32>
    %53 = arith.negf %52 : vector<8x96xf32>
    %54 = math.exp %53 : vector<8x96xf32>
    %cst_17 = arith.constant 1.000000e+00 : f32
    %55 = vector.broadcast %cst_17 : f32 to vector<8x96xf32>
    %56 = arith.addf %55, %54 : vector<8x96xf32>
    %57 = arith.divf %55, %56 : vector<8x96xf32>
    %58 = vector.extract_strided_slice %51 {offsets = [0, 96], sizes = [8, 32], strides = [1, 1]} : vector<8x128xf32> to vector<8x32xf32>
    %59 = math.tanh %58 : vector<8x32xf32>
    %60 = vector.extract_strided_slice %57 {offsets = [0, 0], sizes = [8, 32], strides = [1, 1]} : vector<8x96xf32> to vector<8x32xf32>
    %61 = vector.extract_strided_slice %57 {offsets = [0, 32], sizes = [8, 32], strides = [1, 1]} : vector<8x96xf32> to vector<8x32xf32>
    %62 = vector.extract_strided_slice %57 {offsets = [0, 64], sizes = [8, 32], strides = [1, 1]} : vector<8x96xf32> to vector<8x32xf32>
    %63 = arith.mulf %61, %45 : vector<8x32xf32>
    %64 = arith.mulf %60, %59 : vector<8x32xf32>
    %65 = arith.addf %63, %64 : vector<8x32xf32>
    %66 = math.tanh %65 : vector<8x32xf32>
    %67 = arith.mulf %62, %66 : vector<8x32xf32>
    %c16 = arith.constant 16 : index
    %c0_18 = arith.constant 0 : index
    %68 = vector.load %arg12[%c16, %c0_18] : memref<64x32xf32, #tpu.memory_space<vmem>>, vector<8x32xf32>
    tpu.vector_store %arg12[%c16, %c0_18], %67 {strides = array<i32>} : memref<64x32xf32, #tpu.memory_space<vmem>>, vector<8x32xf32>,
    %69 = vector.extract_strided_slice %6 {offsets = [24, 0], sizes = [8, 128], strides = [1, 1]} : vector<64x128xf32> to vector<8x128xf32>
    %cst_19 = arith.constant dense<0.000000e+00> : vector<8x128xf32>
    %70 = tpu.matmul %67, %1, %cst_19 {dimension_numbers = #tpu.dot_dimension_numbers<[1], [0], [0], [1], [0, 0, 1, 1], [], []>} : vector<8x32xf32>, vector<32x128xf32>, vector<8x128xf32> -> vector<8x128xf32>
    %71 = arith.addf %69, %70 : vector<8x128xf32>
    %72 = vector.extract_strided_slice %71 {offsets = [0, 0], sizes = [8, 96], strides = [1, 1]} : vector<8x128xf32> to vector<8x96xf32>
    %73 = arith.negf %72 : vector<8x96xf32>
    %74 = math.exp %73 : vector<8x96xf32>
    %cst_20 = arith.constant 1.000000e+00 : f32
    %75 = vector.broadcast %cst_20 : f32 to vector<8x96xf32>
    %76 = arith.addf %75, %74 : vector<8x96xf32>
    %77 = arith.divf %75, %76 : vector<8x96xf32>
    %78 = vector.extract_strided_slice %71 {offsets = [0, 96], sizes = [8, 32], strides = [1, 1]} : vector<8x128xf32> to vector<8x32xf32>
    %79 = math.tanh %78 : vector<8x32xf32>
    %80 = vector.extract_strided_slice %77 {offsets = [0, 0], sizes = [8, 32], strides = [1, 1]} : vector<8x96xf32> to vector<8x32xf32>
    %81 = vector.extract_strided_slice %77 {offsets = [0, 32], sizes = [8, 32], strides = [1, 1]} : vector<8x96xf32> to vector<8x32xf32>
    %82 = vector.extract_strided_slice %77 {offsets = [0, 64], sizes = [8, 32], strides = [1, 1]} : vector<8x96xf32> to vector<8x32xf32>
    %83 = arith.mulf %81, %65 : vector<8x32xf32>
    %84 = arith.mulf %80, %79 : vector<8x32xf32>
    %85 = arith.addf %83, %84 : vector<8x32xf32>
    %86 = math.tanh %85 : vector<8x32xf32>
    %87 = arith.mulf %82, %86 : vector<8x32xf32>
    %c24 = arith.constant 24 : index
    %c0_21 = arith.constant 0 : index
    %88 = vector.load %arg12[%c24, %c0_21] : memref<64x32xf32, #tpu.memory_space<vmem>>, vector<8x32xf32>
    tpu.vector_store %arg12[%c24, %c0_21], %87 {strides = array<i32>} : memref<64x32xf32, #tpu.memory_space<vmem>>, vector<8x32xf32>,
    %89 = vector.extract_strided_slice %6 {offsets = [32, 0], sizes = [8, 128], strides = [1, 1]} : vector<64x128xf32> to vector<8x128xf32>
    %cst_22 = arith.constant dense<0.000000e+00> : vector<8x128xf32>
    %90 = tpu.matmul %87, %1, %cst_22 {dimension_numbers = #tpu.dot_dimension_numbers<[1], [0], [0], [1], [0, 0, 1, 1], [], []>} : vector<8x32xf32>, vector<32x128xf32>, vector<8x128xf32> -> vector<8x128xf32>
    %91 = arith.addf %89, %90 : vector<8x128xf32>
    %92 = vector.extract_strided_slice %91 {offsets = [0, 0], sizes = [8, 96], strides = [1, 1]} : vector<8x128xf32> to vector<8x96xf32>
    %93 = arith.negf %92 : vector<8x96xf32>
    %94 = math.exp %93 : vector<8x96xf32>
    %cst_23 = arith.constant 1.000000e+00 : f32
    %95 = vector.broadcast %cst_23 : f32 to vector<8x96xf32>
    %96 = arith.addf %95, %94 : vector<8x96xf32>
    %97 = arith.divf %95, %96 : vector<8x96xf32>
    %98 = vector.extract_strided_slice %91 {offsets = [0, 96], sizes = [8, 32], strides = [1, 1]} : vector<8x128xf32> to vector<8x32xf32>
    %99 = math.tanh %98 : vector<8x32xf32>
    %100 = vector.extract_strided_slice %97 {offsets = [0, 0], sizes = [8, 32], strides = [1, 1]} : vector<8x96xf32> to vector<8x32xf32>
    %101 = vector.extract_strided_slice %97 {offsets = [0, 32], sizes = [8, 32], strides = [1, 1]} : vector<8x96xf32> to vector<8x32xf32>
    %102 = vector.extract_strided_slice %97 {offsets = [0, 64], sizes = [8, 32], strides = [1, 1]} : vector<8x96xf32> to vector<8x32xf32>
    %103 = arith.mulf %101, %85 : vector<8x32xf32>
    %104 = arith.mulf %100, %99 : vector<8x32xf32>
    %105 = arith.addf %103, %104 : vector<8x32xf32>
    %106 = math.tanh %105 : vector<8x32xf32>
    %107 = arith.mulf %102, %106 : vector<8x32xf32>
    %c32 = arith.constant 32 : index
    %c0_24 = arith.constant 0 : index
    %108 = vector.load %arg12[%c32, %c0_24] : memref<64x32xf32, #tpu.memory_space<vmem>>, vector<8x32xf32>
    tpu.vector_store %arg12[%c32, %c0_24], %107 {strides = array<i32>} : memref<64x32xf32, #tpu.memory_space<vmem>>, vector<8x32xf32>,
    %109 = vector.extract_strided_slice %6 {offsets = [40, 0], sizes = [8, 128], strides = [1, 1]} : vector<64x128xf32> to vector<8x128xf32>
    %cst_25 = arith.constant dense<0.000000e+00> : vector<8x128xf32>
    %110 = tpu.matmul %107, %1, %cst_25 {dimension_numbers = #tpu.dot_dimension_numbers<[1], [0], [0], [1], [0, 0, 1, 1], [], []>} : vector<8x32xf32>, vector<32x128xf32>, vector<8x128xf32> -> vector<8x128xf32>
    %111 = arith.addf %109, %110 : vector<8x128xf32>
    %112 = vector.extract_strided_slice %111 {offsets = [0, 0], sizes = [8, 96], strides = [1, 1]} : vector<8x128xf32> to vector<8x96xf32>
    %113 = arith.negf %112 : vector<8x96xf32>
    %114 = math.exp %113 : vector<8x96xf32>
    %cst_26 = arith.constant 1.000000e+00 : f32
    %115 = vector.broadcast %cst_26 : f32 to vector<8x96xf32>
    %116 = arith.addf %115, %114 : vector<8x96xf32>
    %117 = arith.divf %115, %116 : vector<8x96xf32>
    %118 = vector.extract_strided_slice %111 {offsets = [0, 96], sizes = [8, 32], strides = [1, 1]} : vector<8x128xf32> to vector<8x32xf32>
    %119 = math.tanh %118 : vector<8x32xf32>
    %120 = vector.extract_strided_slice %117 {offsets = [0, 0], sizes = [8, 32], strides = [1, 1]} : vector<8x96xf32> to vector<8x32xf32>
    %121 = vector.extract_strided_slice %117 {offsets = [0, 32], sizes = [8, 32], strides = [1, 1]} : vector<8x96xf32> to vector<8x32xf32>
    %122 = vector.extract_strided_slice %117 {offsets = [0, 64], sizes = [8, 32], strides = [1, 1]} : vector<8x96xf32> to vector<8x32xf32>
    %123 = arith.mulf %121, %105 : vector<8x32xf32>
    %124 = arith.mulf %120, %119 : vector<8x32xf32>
    %125 = arith.addf %123, %124 : vector<8x32xf32>
    %126 = math.tanh %125 : vector<8x32xf32>
    %127 = arith.mulf %122, %126 : vector<8x32xf32>
    %c40 = arith.constant 40 : index
    %c0_27 = arith.constant 0 : index
    %128 = vector.load %arg12[%c40, %c0_27] : memref<64x32xf32, #tpu.memory_space<vmem>>, vector<8x32xf32>
    tpu.vector_store %arg12[%c40, %c0_27], %127 {strides = array<i32>} : memref<64x32xf32, #tpu.memory_space<vmem>>, vector<8x32xf32>,
    %129 = vector.extract_strided_slice %6 {offsets = [48, 0], sizes = [8, 128], strides = [1, 1]} : vector<64x128xf32> to vector<8x128xf32>
    %cst_28 = arith.constant dense<0.000000e+00> : vector<8x128xf32>
    %130 = tpu.matmul %127, %1, %cst_28 {dimension_numbers = #tpu.dot_dimension_numbers<[1], [0], [0], [1], [0, 0, 1, 1], [], []>} : vector<8x32xf32>, vector<32x128xf32>, vector<8x128xf32> -> vector<8x128xf32>
    %131 = arith.addf %129, %130 : vector<8x128xf32>
    %132 = vector.extract_strided_slice %131 {offsets = [0, 0], sizes = [8, 96], strides = [1, 1]} : vector<8x128xf32> to vector<8x96xf32>
    %133 = arith.negf %132 : vector<8x96xf32>
    %134 = math.exp %133 : vector<8x96xf32>
    %cst_29 = arith.constant 1.000000e+00 : f32
    %135 = vector.broadcast %cst_29 : f32 to vector<8x96xf32>
    %136 = arith.addf %135, %134 : vector<8x96xf32>
    %137 = arith.divf %135, %136 : vector<8x96xf32>
    %138 = vector.extract_strided_slice %131 {offsets = [0, 96], sizes = [8, 32], strides = [1, 1]} : vector<8x128xf32> to vector<8x32xf32>
    %139 = math.tanh %138 : vector<8x32xf32>
    %140 = vector.extract_strided_slice %137 {offsets = [0, 0], sizes = [8, 32], strides = [1, 1]} : vector<8x96xf32> to vector<8x32xf32>
    %141 = vector.extract_strided_slice %137 {offsets = [0, 32], sizes = [8, 32], strides = [1, 1]} : vector<8x96xf32> to vector<8x32xf32>
    %142 = vector.extract_strided_slice %137 {offsets = [0, 64], sizes = [8, 32], strides = [1, 1]} : vector<8x96xf32> to vector<8x32xf32>
    %143 = arith.mulf %141, %125 : vector<8x32xf32>
    %144 = arith.mulf %140, %139 : vector<8x32xf32>
    %145 = arith.addf %143, %144 : vector<8x32xf32>
    %146 = math.tanh %145 : vector<8x32xf32>
    %147 = arith.mulf %142, %146 : vector<8x32xf32>
    %c48 = arith.constant 48 : index
    %c0_30 = arith.constant 0 : index
    %148 = vector.load %arg12[%c48, %c0_30] : memref<64x32xf32, #tpu.memory_space<vmem>>, vector<8x32xf32>
    tpu.vector_store %arg12[%c48, %c0_30], %147 {strides = array<i32>} : memref<64x32xf32, #tpu.memory_space<vmem>>, vector<8x32xf32>,
    %149 = vector.extract_strided_slice %6 {offsets = [56, 0], sizes = [8, 128], strides = [1, 1]} : vector<64x128xf32> to vector<8x128xf32>
    %cst_31 = arith.constant dense<0.000000e+00> : vector<8x128xf32>
    %150 = tpu.matmul %147, %1, %cst_31 {dimension_numbers = #tpu.dot_dimension_numbers<[1], [0], [0], [1], [0, 0, 1, 1], [], []>} : vector<8x32xf32>, vector<32x128xf32>, vector<8x128xf32> -> vector<8x128xf32>
    %151 = arith.addf %149, %150 : vector<8x128xf32>
    %152 = vector.extract_strided_slice %151 {offsets = [0, 0], sizes = [8, 96], strides = [1, 1]} : vector<8x128xf32> to vector<8x96xf32>
    %153 = arith.negf %152 : vector<8x96xf32>
    %154 = math.exp %153 : vector<8x96xf32>
    %cst_32 = arith.constant 1.000000e+00 : f32
    %155 = vector.broadcast %cst_32 : f32 to vector<8x96xf32>
    %156 = arith.addf %155, %154 : vector<8x96xf32>
    %157 = arith.divf %155, %156 : vector<8x96xf32>
    %158 = vector.extract_strided_slice %151 {offsets = [0, 96], sizes = [8, 32], strides = [1, 1]} : vector<8x128xf32> to vector<8x32xf32>
    %159 = math.tanh %158 : vector<8x32xf32>
    %160 = vector.extract_strided_slice %157 {offsets = [0, 0], sizes = [8, 32], strides = [1, 1]} : vector<8x96xf32> to vector<8x32xf32>
    %161 = vector.extract_strided_slice %157 {offsets = [0, 32], sizes = [8, 32], strides = [1, 1]} : vector<8x96xf32> to vector<8x32xf32>
    %162 = vector.extract_strided_slice %157 {offsets = [0, 64], sizes = [8, 32], strides = [1, 1]} : vector<8x96xf32> to vector<8x32xf32>
    %163 = arith.mulf %161, %145 : vector<8x32xf32>
    %164 = arith.mulf %160, %159 : vector<8x32xf32>
    %165 = arith.addf %163, %164 : vector<8x32xf32>
    %166 = math.tanh %165 : vector<8x32xf32>
    %167 = arith.mulf %162, %166 : vector<8x32xf32>
    %c56 = arith.constant 56 : index
    %c0_33 = arith.constant 0 : index
    %168 = vector.load %arg12[%c56, %c0_33] : memref<64x32xf32, #tpu.memory_space<vmem>>, vector<8x32xf32>
    tpu.vector_store %arg12[%c56, %c0_33], %167 {strides = array<i32>} : memref<64x32xf32, #tpu.memory_space<vmem>>, vector<8x32xf32>,
    %c0_34 = arith.constant 0 : index
    %c0_35 = arith.constant 0 : index
    %169 = vector.load %arg4[%c0_34, %c0_35] : memref<32x128xf32, #tpu.memory_space<vmem>>, vector<32x128xf32>
    %c0_36 = arith.constant 0 : index
    %c0_37 = arith.constant 0 : index
    %170 = vector.load %arg5[%c0_36, %c0_37] : memref<32x128xf32, #tpu.memory_space<vmem>>, vector<32x128xf32>
    %c0_38 = arith.constant 0 : index
    %c0_39 = arith.constant 0 : index
    %171 = vector.load %arg6[%c0_38, %c0_39] : memref<1x128xf32, #tpu.memory_space<vmem>>, vector<1x128xf32>
    %c0_40 = arith.constant 0 : index
    %c0_41 = arith.constant 0 : index
    %172 = vector.load %arg12[%c0_40, %c0_41] : memref<64x32xf32, #tpu.memory_space<vmem>>, vector<64x32xf32>
    %cst_42 = arith.constant dense<0.000000e+00> : vector<64x128xf32>
    %173 = tpu.matmul %172, %169, %cst_42 {dimension_numbers = #tpu.dot_dimension_numbers<[1], [0], [0], [1], [0, 0, 1, 1], [], []>} : vector<64x32xf32>, vector<32x128xf32>, vector<64x128xf32> -> vector<64x128xf32>
    %174 = vector.broadcast %171 : vector<1x128xf32> to vector<64x128xf32>
    %175 = arith.addf %173, %174 : vector<64x128xf32>
    %cst_43 = arith.constant 0.000000e+00 : f32
    %176 = vector.broadcast %cst_43 : f32 to vector<8x32xf32>
    %cst_44 = arith.constant 0.000000e+00 : f32
    %177 = vector.broadcast %cst_44 : f32 to vector<8x32xf32>
    %178 = vector.extract_strided_slice %175 {offsets = [0, 0], sizes = [8, 128], strides = [1, 1]} : vector<64x128xf32> to vector<8x128xf32>
    %cst_45 = arith.constant dense<0.000000e+00> : vector<8x128xf32>
    %179 = tpu.matmul %176, %170, %cst_45 {dimension_numbers = #tpu.dot_dimension_numbers<[1], [0], [0], [1], [0, 0, 1, 1], [], []>} : vector<8x32xf32>, vector<32x128xf32>, vector<8x128xf32> -> vector<8x128xf32>
    %180 = arith.addf %178, %179 : vector<8x128xf32>
    %181 = vector.extract_strided_slice %180 {offsets = [0, 0], sizes = [8, 96], strides = [1, 1]} : vector<8x128xf32> to vector<8x96xf32>
    %182 = arith.negf %181 : vector<8x96xf32>
    %183 = math.exp %182 : vector<8x96xf32>
    %cst_46 = arith.constant 1.000000e+00 : f32
    %184 = vector.broadcast %cst_46 : f32 to vector<8x96xf32>
    %185 = arith.addf %184, %183 : vector<8x96xf32>
    %186 = arith.divf %184, %185 : vector<8x96xf32>
    %187 = vector.extract_strided_slice %180 {offsets = [0, 96], sizes = [8, 32], strides = [1, 1]} : vector<8x128xf32> to vector<8x32xf32>
    %188 = math.tanh %187 : vector<8x32xf32>
    %189 = vector.extract_strided_slice %186 {offsets = [0, 0], sizes = [8, 32], strides = [1, 1]} : vector<8x96xf32> to vector<8x32xf32>
    %190 = vector.extract_strided_slice %186 {offsets = [0, 32], sizes = [8, 32], strides = [1, 1]} : vector<8x96xf32> to vector<8x32xf32>
    %191 = vector.extract_strided_slice %186 {offsets = [0, 64], sizes = [8, 32], strides = [1, 1]} : vector<8x96xf32> to vector<8x32xf32>
    %192 = arith.mulf %190, %177 : vector<8x32xf32>
    %193 = arith.mulf %189, %188 : vector<8x32xf32>
    %194 = arith.addf %192, %193 : vector<8x32xf32>
    %195 = math.tanh %194 : vector<8x32xf32>
    %196 = arith.mulf %191, %195 : vector<8x32xf32>
    %197 = vector.extract_strided_slice %175 {offsets = [8, 0], sizes = [8, 128], strides = [1, 1]} : vector<64x128xf32> to vector<8x128xf32>
    %cst_47 = arith.constant dense<0.000000e+00> : vector<8x128xf32>
    %198 = tpu.matmul %196, %170, %cst_47 {dimension_numbers = #tpu.dot_dimension_numbers<[1], [0], [0], [1], [0, 0, 1, 1], [], []>} : vector<8x32xf32>, vector<32x128xf32>, vector<8x128xf32> -> vector<8x128xf32>
    %199 = arith.addf %197, %198 : vector<8x128xf32>
    %200 = vector.extract_strided_slice %199 {offsets = [0, 0], sizes = [8, 96], strides = [1, 1]} : vector<8x128xf32> to vector<8x96xf32>
    %201 = arith.negf %200 : vector<8x96xf32>
    %202 = math.exp %201 : vector<8x96xf32>
    %cst_48 = arith.constant 1.000000e+00 : f32
    %203 = vector.broadcast %cst_48 : f32 to vector<8x96xf32>
    %204 = arith.addf %203, %202 : vector<8x96xf32>
    %205 = arith.divf %203, %204 : vector<8x96xf32>
    %206 = vector.extract_strided_slice %199 {offsets = [0, 96], sizes = [8, 32], strides = [1, 1]} : vector<8x128xf32> to vector<8x32xf32>
    %207 = math.tanh %206 : vector<8x32xf32>
    %208 = vector.extract_strided_slice %205 {offsets = [0, 0], sizes = [8, 32], strides = [1, 1]} : vector<8x96xf32> to vector<8x32xf32>
    %209 = vector.extract_strided_slice %205 {offsets = [0, 32], sizes = [8, 32], strides = [1, 1]} : vector<8x96xf32> to vector<8x32xf32>
    %210 = vector.extract_strided_slice %205 {offsets = [0, 64], sizes = [8, 32], strides = [1, 1]} : vector<8x96xf32> to vector<8x32xf32>
    %211 = arith.mulf %209, %194 : vector<8x32xf32>
    %212 = arith.mulf %208, %207 : vector<8x32xf32>
    %213 = arith.addf %211, %212 : vector<8x32xf32>
    %214 = math.tanh %213 : vector<8x32xf32>
    %215 = arith.mulf %210, %214 : vector<8x32xf32>
    %216 = vector.extract_strided_slice %175 {offsets = [16, 0], sizes = [8, 128], strides = [1, 1]} : vector<64x128xf32> to vector<8x128xf32>
    %cst_49 = arith.constant dense<0.000000e+00> : vector<8x128xf32>
    %217 = tpu.matmul %215, %170, %cst_49 {dimension_numbers = #tpu.dot_dimension_numbers<[1], [0], [0], [1], [0, 0, 1, 1], [], []>} : vector<8x32xf32>, vector<32x128xf32>, vector<8x128xf32> -> vector<8x128xf32>
    %218 = arith.addf %216, %217 : vector<8x128xf32>
    %219 = vector.extract_strided_slice %218 {offsets = [0, 0], sizes = [8, 96], strides = [1, 1]} : vector<8x128xf32> to vector<8x96xf32>
    %220 = arith.negf %219 : vector<8x96xf32>
    %221 = math.exp %220 : vector<8x96xf32>
    %cst_50 = arith.constant 1.000000e+00 : f32
    %222 = vector.broadcast %cst_50 : f32 to vector<8x96xf32>
    %223 = arith.addf %222, %221 : vector<8x96xf32>
    %224 = arith.divf %222, %223 : vector<8x96xf32>
    %225 = vector.extract_strided_slice %218 {offsets = [0, 96], sizes = [8, 32], strides = [1, 1]} : vector<8x128xf32> to vector<8x32xf32>
    %226 = math.tanh %225 : vector<8x32xf32>
    %227 = vector.extract_strided_slice %224 {offsets = [0, 0], sizes = [8, 32], strides = [1, 1]} : vector<8x96xf32> to vector<8x32xf32>
    %228 = vector.extract_strided_slice %224 {offsets = [0, 32], sizes = [8, 32], strides = [1, 1]} : vector<8x96xf32> to vector<8x32xf32>
    %229 = vector.extract_strided_slice %224 {offsets = [0, 64], sizes = [8, 32], strides = [1, 1]} : vector<8x96xf32> to vector<8x32xf32>
    %230 = arith.mulf %228, %213 : vector<8x32xf32>
    %231 = arith.mulf %227, %226 : vector<8x32xf32>
    %232 = arith.addf %230, %231 : vector<8x32xf32>
    %233 = math.tanh %232 : vector<8x32xf32>
    %234 = arith.mulf %229, %233 : vector<8x32xf32>
    %235 = vector.extract_strided_slice %175 {offsets = [24, 0], sizes = [8, 128], strides = [1, 1]} : vector<64x128xf32> to vector<8x128xf32>
    %cst_51 = arith.constant dense<0.000000e+00> : vector<8x128xf32>
    %236 = tpu.matmul %234, %170, %cst_51 {dimension_numbers = #tpu.dot_dimension_numbers<[1], [0], [0], [1], [0, 0, 1, 1], [], []>} : vector<8x32xf32>, vector<32x128xf32>, vector<8x128xf32> -> vector<8x128xf32>
    %237 = arith.addf %235, %236 : vector<8x128xf32>
    %238 = vector.extract_strided_slice %237 {offsets = [0, 0], sizes = [8, 96], strides = [1, 1]} : vector<8x128xf32> to vector<8x96xf32>
    %239 = arith.negf %238 : vector<8x96xf32>
    %240 = math.exp %239 : vector<8x96xf32>
    %cst_52 = arith.constant 1.000000e+00 : f32
    %241 = vector.broadcast %cst_52 : f32 to vector<8x96xf32>
    %242 = arith.addf %241, %240 : vector<8x96xf32>
    %243 = arith.divf %241, %242 : vector<8x96xf32>
    %244 = vector.extract_strided_slice %237 {offsets = [0, 96], sizes = [8, 32], strides = [1, 1]} : vector<8x128xf32> to vector<8x32xf32>
    %245 = math.tanh %244 : vector<8x32xf32>
    %246 = vector.extract_strided_slice %243 {offsets = [0, 0], sizes = [8, 32], strides = [1, 1]} : vector<8x96xf32> to vector<8x32xf32>
    %247 = vector.extract_strided_slice %243 {offsets = [0, 32], sizes = [8, 32], strides = [1, 1]} : vector<8x96xf32> to vector<8x32xf32>
    %248 = vector.extract_strided_slice %243 {offsets = [0, 64], sizes = [8, 32], strides = [1, 1]} : vector<8x96xf32> to vector<8x32xf32>
    %249 = arith.mulf %247, %232 : vector<8x32xf32>
    %250 = arith.mulf %246, %245 : vector<8x32xf32>
    %251 = arith.addf %249, %250 : vector<8x32xf32>
    %252 = math.tanh %251 : vector<8x32xf32>
    %253 = arith.mulf %248, %252 : vector<8x32xf32>
    %254 = vector.extract_strided_slice %175 {offsets = [32, 0], sizes = [8, 128], strides = [1, 1]} : vector<64x128xf32> to vector<8x128xf32>
    %cst_53 = arith.constant dense<0.000000e+00> : vector<8x128xf32>
    %255 = tpu.matmul %253, %170, %cst_53 {dimension_numbers = #tpu.dot_dimension_numbers<[1], [0], [0], [1], [0, 0, 1, 1], [], []>} : vector<8x32xf32>, vector<32x128xf32>, vector<8x128xf32> -> vector<8x128xf32>
    %256 = arith.addf %254, %255 : vector<8x128xf32>
    %257 = vector.extract_strided_slice %256 {offsets = [0, 0], sizes = [8, 96], strides = [1, 1]} : vector<8x128xf32> to vector<8x96xf32>
    %258 = arith.negf %257 : vector<8x96xf32>
    %259 = math.exp %258 : vector<8x96xf32>
    %cst_54 = arith.constant 1.000000e+00 : f32
    %260 = vector.broadcast %cst_54 : f32 to vector<8x96xf32>
    %261 = arith.addf %260, %259 : vector<8x96xf32>
    %262 = arith.divf %260, %261 : vector<8x96xf32>
    %263 = vector.extract_strided_slice %256 {offsets = [0, 96], sizes = [8, 32], strides = [1, 1]} : vector<8x128xf32> to vector<8x32xf32>
    %264 = math.tanh %263 : vector<8x32xf32>
    %265 = vector.extract_strided_slice %262 {offsets = [0, 0], sizes = [8, 32], strides = [1, 1]} : vector<8x96xf32> to vector<8x32xf32>
    %266 = vector.extract_strided_slice %262 {offsets = [0, 32], sizes = [8, 32], strides = [1, 1]} : vector<8x96xf32> to vector<8x32xf32>
    %267 = vector.extract_strided_slice %262 {offsets = [0, 64], sizes = [8, 32], strides = [1, 1]} : vector<8x96xf32> to vector<8x32xf32>
    %268 = arith.mulf %266, %251 : vector<8x32xf32>
    %269 = arith.mulf %265, %264 : vector<8x32xf32>
    %270 = arith.addf %268, %269 : vector<8x32xf32>
    %271 = math.tanh %270 : vector<8x32xf32>
    %272 = arith.mulf %267, %271 : vector<8x32xf32>
    %273 = vector.extract_strided_slice %175 {offsets = [40, 0], sizes = [8, 128], strides = [1, 1]} : vector<64x128xf32> to vector<8x128xf32>
    %cst_55 = arith.constant dense<0.000000e+00> : vector<8x128xf32>
    %274 = tpu.matmul %272, %170, %cst_55 {dimension_numbers = #tpu.dot_dimension_numbers<[1], [0], [0], [1], [0, 0, 1, 1], [], []>} : vector<8x32xf32>, vector<32x128xf32>, vector<8x128xf32> -> vector<8x128xf32>
    %275 = arith.addf %273, %274 : vector<8x128xf32>
    %276 = vector.extract_strided_slice %275 {offsets = [0, 0], sizes = [8, 96], strides = [1, 1]} : vector<8x128xf32> to vector<8x96xf32>
    %277 = arith.negf %276 : vector<8x96xf32>
    %278 = math.exp %277 : vector<8x96xf32>
    %cst_56 = arith.constant 1.000000e+00 : f32
    %279 = vector.broadcast %cst_56 : f32 to vector<8x96xf32>
    %280 = arith.addf %279, %278 : vector<8x96xf32>
    %281 = arith.divf %279, %280 : vector<8x96xf32>
    %282 = vector.extract_strided_slice %275 {offsets = [0, 96], sizes = [8, 32], strides = [1, 1]} : vector<8x128xf32> to vector<8x32xf32>
    %283 = math.tanh %282 : vector<8x32xf32>
    %284 = vector.extract_strided_slice %281 {offsets = [0, 0], sizes = [8, 32], strides = [1, 1]} : vector<8x96xf32> to vector<8x32xf32>
    %285 = vector.extract_strided_slice %281 {offsets = [0, 32], sizes = [8, 32], strides = [1, 1]} : vector<8x96xf32> to vector<8x32xf32>
    %286 = vector.extract_strided_slice %281 {offsets = [0, 64], sizes = [8, 32], strides = [1, 1]} : vector<8x96xf32> to vector<8x32xf32>
    %287 = arith.mulf %285, %270 : vector<8x32xf32>
    %288 = arith.mulf %284, %283 : vector<8x32xf32>
    %289 = arith.addf %287, %288 : vector<8x32xf32>
    %290 = math.tanh %289 : vector<8x32xf32>
    %291 = arith.mulf %286, %290 : vector<8x32xf32>
    %292 = vector.extract_strided_slice %175 {offsets = [48, 0], sizes = [8, 128], strides = [1, 1]} : vector<64x128xf32> to vector<8x128xf32>
    %cst_57 = arith.constant dense<0.000000e+00> : vector<8x128xf32>
    %293 = tpu.matmul %291, %170, %cst_57 {dimension_numbers = #tpu.dot_dimension_numbers<[1], [0], [0], [1], [0, 0, 1, 1], [], []>} : vector<8x32xf32>, vector<32x128xf32>, vector<8x128xf32> -> vector<8x128xf32>
    %294 = arith.addf %292, %293 : vector<8x128xf32>
    %295 = vector.extract_strided_slice %294 {offsets = [0, 0], sizes = [8, 96], strides = [1, 1]} : vector<8x128xf32> to vector<8x96xf32>
    %296 = arith.negf %295 : vector<8x96xf32>
    %297 = math.exp %296 : vector<8x96xf32>
    %cst_58 = arith.constant 1.000000e+00 : f32
    %298 = vector.broadcast %cst_58 : f32 to vector<8x96xf32>
    %299 = arith.addf %298, %297 : vector<8x96xf32>
    %300 = arith.divf %298, %299 : vector<8x96xf32>
    %301 = vector.extract_strided_slice %294 {offsets = [0, 96], sizes = [8, 32], strides = [1, 1]} : vector<8x128xf32> to vector<8x32xf32>
    %302 = math.tanh %301 : vector<8x32xf32>
    %303 = vector.extract_strided_slice %300 {offsets = [0, 0], sizes = [8, 32], strides = [1, 1]} : vector<8x96xf32> to vector<8x32xf32>
    %304 = vector.extract_strided_slice %300 {offsets = [0, 32], sizes = [8, 32], strides = [1, 1]} : vector<8x96xf32> to vector<8x32xf32>
    %305 = vector.extract_strided_slice %300 {offsets = [0, 64], sizes = [8, 32], strides = [1, 1]} : vector<8x96xf32> to vector<8x32xf32>
    %306 = arith.mulf %304, %289 : vector<8x32xf32>
    %307 = arith.mulf %303, %302 : vector<8x32xf32>
    %308 = arith.addf %306, %307 : vector<8x32xf32>
    %309 = math.tanh %308 : vector<8x32xf32>
    %310 = arith.mulf %305, %309 : vector<8x32xf32>
    %311 = vector.extract_strided_slice %175 {offsets = [56, 0], sizes = [8, 128], strides = [1, 1]} : vector<64x128xf32> to vector<8x128xf32>
    %cst_59 = arith.constant dense<0.000000e+00> : vector<8x128xf32>
    %312 = tpu.matmul %310, %170, %cst_59 {dimension_numbers = #tpu.dot_dimension_numbers<[1], [0], [0], [1], [0, 0, 1, 1], [], []>} : vector<8x32xf32>, vector<32x128xf32>, vector<8x128xf32> -> vector<8x128xf32>
    %313 = arith.addf %311, %312 : vector<8x128xf32>
    %314 = vector.extract_strided_slice %313 {offsets = [0, 0], sizes = [8, 96], strides = [1, 1]} : vector<8x128xf32> to vector<8x96xf32>
    %315 = arith.negf %314 : vector<8x96xf32>
    %316 = math.exp %315 : vector<8x96xf32>
    %cst_60 = arith.constant 1.000000e+00 : f32
    %317 = vector.broadcast %cst_60 : f32 to vector<8x96xf32>
    %318 = arith.addf %317, %316 : vector<8x96xf32>
    %319 = arith.divf %317, %318 : vector<8x96xf32>
    %320 = vector.extract_strided_slice %313 {offsets = [0, 96], sizes = [8, 32], strides = [1, 1]} : vector<8x128xf32> to vector<8x32xf32>
    %321 = math.tanh %320 : vector<8x32xf32>
    %322 = vector.extract_strided_slice %319 {offsets = [0, 0], sizes = [8, 32], strides = [1, 1]} : vector<8x96xf32> to vector<8x32xf32>
    %323 = vector.extract_strided_slice %319 {offsets = [0, 32], sizes = [8, 32], strides = [1, 1]} : vector<8x96xf32> to vector<8x32xf32>
    %324 = vector.extract_strided_slice %319 {offsets = [0, 64], sizes = [8, 32], strides = [1, 1]} : vector<8x96xf32> to vector<8x32xf32>
    %325 = arith.mulf %323, %308 : vector<8x32xf32>
    %326 = arith.mulf %322, %321 : vector<8x32xf32>
    %327 = arith.addf %325, %326 : vector<8x32xf32>
    %328 = math.tanh %327 : vector<8x32xf32>
    %329 = arith.mulf %324, %328 : vector<8x32xf32>
    %330 = tpu.concatenate %167, %329 in 0 : vector<8x32xf32>, vector<8x32xf32> -> vector<16x32xf32>
    %cst_61 = arith.constant 0.000000e+00 : f32
    %331 = vector.broadcast %cst_61 : f32 to vector<16x32xf32>
    %332 = arith.maximumf %330, %331 : vector<16x32xf32>
    %c0_62 = arith.constant 0 : index
    %c0_63 = arith.constant 0 : index
    %333 = vector.load %arg7[%c0_62, %c0_63] : memref<32x128xf32, #tpu.memory_space<vmem>>, vector<32x128xf32>
    %cst_64 = arith.constant dense<0.000000e+00> : vector<16x128xf32>
    %334 = tpu.matmul %332, %333, %cst_64 {dimension_numbers = #tpu.dot_dimension_numbers<[1], [0], [0], [1], [0, 0, 1, 1], [], []>} : vector<16x32xf32>, vector<32x128xf32>, vector<16x128xf32> -> vector<16x128xf32>
    %c0_65 = arith.constant 0 : index
    %c0_66 = arith.constant 0 : index
    %335 = vector.load %arg8[%c0_65, %c0_66] : memref<1x128xf32, #tpu.memory_space<vmem>>, vector<1x128xf32>
    %336 = vector.broadcast %335 : vector<1x128xf32> to vector<16x128xf32>
    %337 = arith.addf %334, %336 : vector<16x128xf32>
    %cst_67 = arith.constant 0.000000e+00 : f32
    %338 = vector.broadcast %cst_67 : f32 to vector<16x128xf32>
    %339 = arith.maximumf %337, %338 : vector<16x128xf32>
    %c0_68 = arith.constant 0 : index
    %c0_69 = arith.constant 0 : index
    %340 = vector.load %arg9[%c0_68, %c0_69] : memref<128x4xf32, #tpu.memory_space<vmem>>, vector<128x4xf32>
    %cst_70 = arith.constant dense<0.000000e+00> : vector<16x4xf32>
    %341 = tpu.matmul %339, %340, %cst_70 {dimension_numbers = #tpu.dot_dimension_numbers<[1], [0], [0], [1], [0, 0, 1, 1], [], []>} : vector<16x128xf32>, vector<128x4xf32>, vector<16x4xf32> -> vector<16x4xf32>
    %c0_71 = arith.constant 0 : index
    %c0_72 = arith.constant 0 : index
    %342 = vector.load %arg10[%c0_71, %c0_72] : memref<1x4xf32, #tpu.memory_space<vmem>>, vector<1x4xf32>
    %343 = vector.broadcast %342 : vector<1x4xf32> to vector<16x4xf32>
    %344 = arith.addf %341, %343 : vector<16x4xf32>
    %345 = arith.negf %344 : vector<16x4xf32>
    %346 = math.exp %345 : vector<16x4xf32>
    %cst_73 = arith.constant 1.000000e+00 : f32
    %347 = vector.broadcast %cst_73 : f32 to vector<16x4xf32>
    %348 = arith.addf %347, %346 : vector<16x4xf32>
    %349 = arith.divf %347, %348 : vector<16x4xf32>
    %c0_74 = arith.constant 0 : index
    %c0_75 = arith.constant 0 : index
    %350 = vector.load %arg11[%c0_74, %c0_75] : memref<16x4xf32, #tpu.memory_space<vmem>>, vector<16x4xf32>
    tpu.vector_store %arg11[%c0_74, %c0_75], %349 {strides = array<i32>} : memref<16x4xf32, #tpu.memory_space<vmem>>, vector<16x4xf32>,
    return
  }
}

</mosaic_0001>

<llo_original>
// kernel: lstm_forward.1
$region0: #{lstm_forward.1}
  #allocation0 [shape = 'u32[]', space=smem, size = 0x4, offset = 0x4, fixed_abs, tag = 'smem constant byte address 0x4 - core index']
  #allocation1 [shape = 'u32[144,128]{1,0:T(1,128)}', space=vmem, size = 0x12000, scoped, tag = 'internal scratch']
  #allocation2 [shape = 'f32[64,32]{1,0:T(8,128)}', space=vmem, size = 0x8000, scoped, tag = 'scratch operand']
  %s0 = inlined_call_operand.vmem [shape: f32[64,16], index: 0, kind: input, shape index: {}]
  %s1 = inlined_call_operand.vmem [shape: f32[16,128], index: 1, kind: input, shape index: {}]
  %s2 = inlined_call_operand.vmem [shape: f32[32,128], index: 2, kind: input, shape index: {}]
  %s3 = inlined_call_operand.vmem [shape: f32[1,128], index: 3, kind: input, shape index: {}]
  %s4 = inlined_call_operand.vmem [shape: f32[32,128], index: 4, kind: input, shape index: {}]
  %s5 = inlined_call_operand.vmem [shape: f32[32,128], index: 5, kind: input, shape index: {}]
  %s6 = inlined_call_operand.vmem [shape: f32[1,128], index: 6, kind: input, shape index: {}]
  %s7 = inlined_call_operand.vmem [shape: f32[32,128], index: 7, kind: input, shape index: {}]
  %s8 = inlined_call_operand.vmem [shape: f32[1,128], index: 8, kind: input, shape index: {}]
  %s9 = inlined_call_operand.vmem [shape: f32[128,4], index: 9, kind: input, shape index: {}]
  %s10 = inlined_call_operand.vmem [shape: f32[1,4], index: 10, kind: input, shape index: {}]
  %s11 = inlined_call_operand.vmem [shape: f32[16,4], index: 11, kind: output, shape index: {}]
  %s12 = sld [smem:[#allocation0]]
  $region54: #{lstm_forward.1} parent=0
    _
  %s14 = ssub.s32 1, %s12
  %s15 = scalar_select 0, %s14, %s12
  // Predicated region
  $region2: #{lstm_forward.1} parent=0 // pred_check
    _
  $region3: #{lstm_forward.1} parent=0 // pred_check_branch
    %17 = sbr.rel (0) target = $region5
  $region4: #{lstm_forward.1} parent=0 // pred_region
    _
  $region5: #{lstm_forward.1} parent=0 // pred_fallthru
    _
  // Predicated region
  $region6: #{lstm_forward.1} parent=0 // pred_check
    _
  $region7: #{lstm_forward.1} parent=0 // pred_check_branch
    %19 = sbr.rel (0) target = $region9
  $region8: #{lstm_forward.1} parent=0 // pred_region
    _
  $region9: #{lstm_forward.1} parent=0 // pred_fallthru
    _
  // Predicated region
  $region10: #{lstm_forward.1} parent=0 // pred_check
    _
  $region11: #{lstm_forward.1} parent=0 // pred_check_branch
    %21 = sbr.rel (0) target = $region13
  $region12: #{lstm_forward.1} parent=0 // pred_region
    _
  $region13: #{lstm_forward.1} parent=0 // pred_fallthru
    _
  // Predicated region
  $region14: #{lstm_forward.1} parent=0 // pred_check
    _
  $region15: #{lstm_forward.1} parent=0 // pred_check_branch
    %23 = sbr.rel (0) target = $region17
  $region16: #{lstm_forward.1} parent=0 // pred_region
    _
  $region17: #{lstm_forward.1} parent=0 // pred_fallthru
    _
  // Predicated region
  $region18: #{lstm_forward.1} parent=0 // pred_check
    _
  $region19: #{lstm_forward.1} parent=0 // pred_check_branch
    %25 = sbr.rel (0) target = $region21
  $region20: #{lstm_forward.1} parent=0 // pred_region
    _
  $region21: #{lstm_forward.1} parent=0 // pred_fallthru
    _
  // Predicated region
  $region22: #{lstm_forward.1} parent=0 // pred_check
    _
  $region23: #{lstm_forward.1} parent=0 // pred_check_branch
    %27 = sbr.rel (0) target = $region25
  $region24: #{lstm_forward.1} parent=0 // pred_region
    _
  $region25: #{lstm_forward.1} parent=0 // pred_fallthru
    _
  // Predicated region
  $region26: #{lstm_forward.1} parent=0 // pred_check
    _
  $region27: #{lstm_forward.1} parent=0 // pred_check_branch
    %29 = sbr.rel (0) target = $region29
  $region28: #{lstm_forward.1} parent=0 // pred_region
    _
  $region29: #{lstm_forward.1} parent=0 // pred_fallthru
    _
  // Predicated region
  $region30: #{lstm_forward.1} parent=0 // pred_check
    _
  $region31: #{lstm_forward.1} parent=0 // pred_check_branch
    %31 = sbr.rel (0) target = $region33
  $region32: #{lstm_forward.1} parent=0 // pred_region
    _
  $region33: #{lstm_forward.1} parent=0 // pred_fallthru
    _
  // Predicated region
  $region34: #{lstm_forward.1} parent=0 // pred_check
    _
  $region35: #{lstm_forward.1} parent=0 // pred_check_branch
    %33 = sbr.rel (0) target = $region37
  $region36: #{lstm_forward.1} parent=0 // pred_region
    _
  $region37: #{lstm_forward.1} parent=0 // pred_fallthru
    _
  // Predicated region
  $region38: #{lstm_forward.1} parent=0 // pred_check
    _
  $region39: #{lstm_forward.1} parent=0 // pred_check_branch
    %35 = sbr.rel (0) target = $region41
  $region40: #{lstm_forward.1} parent=0 // pred_region
    _
  $region41: #{lstm_forward.1} parent=0 // pred_fallthru
    _
  // Predicated region
  $region42: #{lstm_forward.1} parent=0 // pred_check
    _
  $region43: #{lstm_forward.1} parent=0 // pred_check_branch
    %37 = sbr.rel (0) target = $region45
  $region44: #{lstm_forward.1} parent=0 // pred_region
    _
  $region45: #{lstm_forward.1} parent=0 // pred_fallthru
    _
  %v38 = vld [vmem:[%s1] sm:$0xff]
  %v39 = vld [vmem:[%s1 + $0x8] sm:$0xff]
  %v40 = vld [vmem:[%s2] sm:$0xff]
  %v41 = vld [vmem:[%s2 + $0x8] sm:$0xff]
  %v42 = vld [vmem:[%s2 + $0x10] sm:$0xff]
  %v43 = vld [vmem:[%s2 + $0x18] sm:$0xff]
  %v44 = vld [vmem:[%s3] sm:$0x1]
  %v45 = vld [vmem:[%s0] sm:$0xff]
  %v46 = vld [vmem:[%s0 + $0x8] sm:$0xff]
  %v47 = vld [vmem:[%s0 + $0x10] sm:$0xff]
  %v48 = vld [vmem:[%s0 + $0x18] sm:$0xff]
  %v49 = vld [vmem:[%s0 + $0x20] sm:$0xff]
  %v50 = vld [vmem:[%s0 + $0x28] sm:$0xff]
  %v51 = vld [vmem:[%s0 + $0x30] sm:$0xff]
  %v52 = vld [vmem:[%s0 + $0x38] sm:$0xff]
  %v54 = vlaneseq
  %v55 = vshrl.u32 %v54, 7
  %v56 = vsub.s32 0, %v55
  %v57 = vrot.slane %v44, %v56
  %vm59 = vcmask 130048
  %v61 = vsel %vm59, %v45, 0
  %v64 = vsel %vm59, %v46, 0
  %v67 = vsel %vm59, %v47, 0
  %v70 = vsel %vm59, %v48, 0
  %v73 = vsel %vm59, %v49, 0
  %v76 = vsel %vm59, %v50, 0
  %v79 = vsel %vm59, %v51, 0
  %v82 = vsel %vm59, %v52, 0
  %84 = vmatprep.subr.mxu0 0.0
  %85 = vmatpush1.msra.mxu0 0.0
  %86 = vmatprep.subr.mxu0 0.0
  %87 = vmatpush1.msra.mxu0 0.0
  %88 = vmatprep.subr.mxu0 0.0
  %89 = vmatpush1.msra.mxu0 0.0
  %90 = vmatprep.subr.mxu0 0.0
  %91 = vmatpush1.msra.mxu0 0.0
  %92 = vmatprep.subr.mxu0 0.0
  %93 = vmatpush1.msra.mxu0 0.0
  %94 = vmatprep.subr.mxu0 0.0
  %95 = vmatpush1.msra.mxu0 0.0
  %96 = vmatprep.subr.mxu0 0.0
  %97 = vmatpush1.msra.mxu0 0.0
  %98 = vmatprep.subr.mxu0 0.0
  %99 = vmatpush1.msra.mxu0 0.0
  %100 = vmatprep.subr.mxu0 0.0
  %101 = vmatpush1.msra.mxu0 0.0
  %102 = vmatprep.subr.mxu0 0.0
  %103 = vmatpush1.msra.mxu0 0.0
  %104 = vmatprep.subr.mxu0 0.0
  %105 = vmatpush1.msra.mxu0 0.0
  %106 = vmatprep.subr.mxu0 0.0
  %107 = vmatpush1.msra.mxu0 0.0
  %108 = vmatprep.subr.mxu0 0.0
  %109 = vmatpush1.msra.mxu0 0.0
  %110 = vmatprep.subr.mxu0 0.0
  %111 = vmatpush1.msra.mxu0 0.0
  %112 = vmatprep.subr.mxu0 0.0
  %113 = vmatpush1.msra.mxu0 %v39
  %114 = vmatprep.subr.mxu0 0.0
  %115 = vmatpush1.msra.mxu0 %v38
  %116 = vmatprep.subr.mxu0 0.0
  %117 = vmatpush2.msra.mxu0 0.0
  %118 = vmatprep.subr.mxu0 0.0
  %119 = vmatpush2.msra.mxu0 0.0
  %120 = vmatprep.subr.mxu0 0.0
  %121 = vmatpush2.msra.mxu0 0.0
  %122 = vmatprep.subr.mxu0 0.0
  %123 = vmatpush2.msra.mxu0 0.0
  %124 = vmatprep.subr.mxu0 0.0
  %125 = vmatpush2.msra.mxu0 0.0
  %126 = vmatprep.subr.mxu0 0.0
  %127 = vmatpush2.msra.mxu0 0.0
  %128 = vmatprep.subr.mxu0 0.0
  %129 = vmatpush2.msra.mxu0 0.0
  %130 = vmatprep.subr.mxu0 0.0
  %131 = vmatpush2.msra.mxu0 0.0
  %132 = vmatprep.subr.mxu0 0.0
  %133 = vmatpush2.msra.mxu0 0.0
  %134 = vmatprep.subr.mxu0 0.0
  %135 = vmatpush2.msra.mxu0 0.0
  %136 = vmatprep.subr.mxu0 0.0
  %137 = vmatpush2.msra.mxu0 0.0
  %138 = vmatprep.subr.mxu0 0.0
  %139 = vmatpush2.msra.mxu0 0.0
  %140 = vmatprep.subr.mxu0 0.0
  %141 = vmatpush2.msra.mxu0 0.0
  %142 = vmatprep.subr.mxu0 0.0
  %143 = vmatpush2.msra.mxu0 0.0
  %144 = vmatprep.subr.mxu0 0.0
  %145 = vmatpush2.msra.mxu0 0.0
  %146 = vmatprep.subr.mxu0 0.0
  %147 = vmatpush2.msra.mxu0 0.0
  %148 = vmatprep.mubr.f32.mxu0 0.0
  %149 = vmatmul.mubr.f32.gmra.mxu0 %v61
  %v150 = vpop.f32.mrf.mxu0
  %v151 = vadd.f32 %v57, %v150
  %v152 = vpop.f32.mrf.mxu0
  %153 = vmatprep.mubr.f32.mxu0 0.0
  %154 = vmatmul.mubr.f32.gmra.mxu0 %v64
  %v155 = vpop.f32.mrf.mxu0
  %v156 = vadd.f32 %v57, %v155
  %v157 = vpop.f32.mrf.mxu0
  %158 = vmatprep.mubr.f32.mxu0 0.0
  %159 = vmatmul.mubr.f32.gmra.mxu0 %v67
  %v160 = vpop.f32.mrf.mxu0
  %v161 = vadd.f32 %v57, %v160
  %v162 = vpop.f32.mrf.mxu0
  %163 = vmatprep.mubr.f32.mxu0 0.0
  %164 = vmatmul.mubr.f32.gmra.mxu0 %v70
  %v165 = vpop.f32.mrf.mxu0
  %v166 = vadd.f32 %v57, %v165
  %v167 = vpop.f32.mrf.mxu0
  %168 = vmatprep.mubr.f32.mxu0 0.0
  %169 = vmatmul.mubr.f32.gmra.mxu0 %v73
  %v170 = vpop.f32.mrf.mxu0
  %v171 = vadd.f32 %v57, %v170
  %v172 = vpop.f32.mrf.mxu0
  %173 = vmatprep.mubr.f32.mxu0 0.0
  %174 = vmatmul.mubr.f32.gmra.mxu0 %v76
  %v175 = vpop.f32.mrf.mxu0
  %v176 = vadd.f32 %v57, %v175
  %v177 = vpop.f32.mrf.mxu0
  %178 = vmatprep.mubr.f32.mxu0 0.0
  %179 = vmatmul.mubr.f32.gmra.mxu0 %v79
  %v180 = vpop.f32.mrf.mxu0
  %v181 = vadd.f32 %v57, %v180
  %v182 = vpop.f32.mrf.mxu0
  %183 = vmatprep.mubr.f32.mxu0 0.0
  %184 = vmatmul.mubr.f32.gmra.mxu0 %v82
  %v185 = vpop.f32.mrf.mxu0
  %v186 = vadd.f32 %v57, %v185
  %v187 = vpop.f32.mrf.mxu0
  %188 = vdwg.mxu0
  %vm189 = vcmask 261120
  %v191 = vsel %vm189, 0.0, 0
  %193 = vmatprep.subr.mxu0 0.0
  %194 = vmatpush1.msra.mxu0 0.0
  %195 = vmatprep.subr.mxu0 0.0
  %196 = vmatpush1.msra.mxu0 0.0
  %197 = vmatprep.subr.mxu0 0.0
  %198 = vmatpush1.msra.mxu0 0.0
  %199 = vmatprep.subr.mxu0 0.0
  %200 = vmatpush1.msra.mxu0 0.0
  %201 = vmatprep.subr.mxu0 0.0
  %202 = vmatpush1.msra.mxu0 0.0
  %203 = vmatprep.subr.mxu0 0.0
  %204 = vmatpush1.msra.mxu0 0.0
  %205 = vmatprep.subr.mxu0 0.0
  %206 = vmatpush1.msra.mxu0 0.0
  %207 = vmatprep.subr.mxu0 0.0
  %208 = vmatpush1.msra.mxu0 0.0
  %209 = vmatprep.subr.mxu0 0.0
  %210 = vmatpush1.msra.mxu0 0.0
  %211 = vmatprep.subr.mxu0 0.0
  %212 = vmatpush1.msra.mxu0 0.0
  %213 = vmatprep.subr.mxu0 0.0
  %214 = vmatpush1.msra.mxu0 0.0
  %215 = vmatprep.subr.mxu0 0.0
  %216 = vmatpush1.msra.mxu0 0.0
  %217 = vmatprep.subr.mxu0 0.0
  %218 = vmatpush1.msra.mxu0 %v43
  %219 = vmatprep.subr.mxu0 0.0
  %220 = vmatpush1.msra.mxu0 %v42
  %221 = vmatprep.subr.mxu0 0.0
  %222 = vmatpush1.msra.mxu0 %v41
  %223 = vmatprep.subr.mxu0 0.0
  %224 = vmatpush1.msra.mxu0 %v40
  %225 = vmatprep.subr.mxu0 0.0
  %226 = vmatpush2.msra.mxu0 0.0
  %227 = vmatprep.subr.mxu0 0.0
  %228 = vmatpush2.msra.mxu0 0.0
  %229 = vmatprep.subr.mxu0 0.0
  %230 = vmatpush2.msra.mxu0 0.0
  %231 = vmatprep.subr.mxu0 0.0
  %232 = vmatpush2.msra.mxu0 0.0
  %233 = vmatprep.subr.mxu0 0.0
  %234 = vmatpush2.msra.mxu0 0.0
  %235 = vmatprep.subr.mxu0 0.0
  %236 = vmatpush2.msra.mxu0 0.0
  %237 = vmatprep.subr.mxu0 0.0
  %238 = vmatpush2.msra.mxu0 0.0
  %239 = vmatprep.subr.mxu0 0.0
  %240 = vmatpush2.msra.mxu0 0.0
  %241 = vmatprep.subr.mxu0 0.0
  %242 = vmatpush2.msra.mxu0 0.0
  %243 = vmatprep.subr.mxu0 0.0
  %244 = vmatpush2.msra.mxu0 0.0
  %245 = vmatprep.subr.mxu0 0.0
  %246 = vmatpush2.msra.mxu0 0.0
  %247 = vmatprep.subr.mxu0 0.0
  %248 = vmatpush2.msra.mxu0 0.0
  %249 = vmatprep.subr.mxu0 0.0
  %250 = vmatpush2.msra.mxu0 0.0
  %251 = vmatprep.subr.mxu0 0.0
  %252 = vmatpush2.msra.mxu0 0.0
  %253 = vmatprep.subr.mxu0 0.0
  %254 = vmatpush2.msra.mxu0 0.0
  %255 = vmatprep.subr.mxu0 0.0
  %256 = vmatpush2.msra.mxu0 0.0
  %257 = vmatprep.mubr.f32.mxu0 0.0
  %258 = vmatmul.mubr.f32.gmra.mxu0 %v191
  %v259 = vpop.f32.mrf.mxu0
  %v260 = vadd.f32 0.0, %v259
  %v261 = vpop.f32.mrf.mxu0
  %262 = vdwg.mxu0
  %v263 = vadd.f32 %v151, %v260
  %v264 = vxor.u32 %v263, 2147483648
  %v265 = vmul.f32 %v264, 1.442695
  %v266 = vpow.pop %v265
  %v267 = vadd.f32 %v266, 1.0
  %v268 = vrcp.pop %v267
  %v269 = vmul.f32 1.0, %v268
  %v270 = vtanh.pop %v263
  %v271 = vmul.f32 %v269, 0.0
  %273 = vrot.lane.b32.xlu0 %v270, 32
  %v274 = vpop.permute.xlu0 %273
  %v276 = vmul.f32 %v269, %v274
  %278 = vrot.lane.b32.xlu0 %v276, 32
  %v279 = vpop.permute.xlu0 %278
  %v281 = vadd.f32 %v271, %v279
  %v282 = vtanh.pop %v281
  %284 = vrot.lane.b32.xlu0 %v282, 32
  %v285 = vpop.permute.xlu0 %284
  %v287 = vmul.f32 %v269, %v285
  %289 = vrot.lane.b32.xlu0 %v287, 64
  %v290 = vpop.permute.xlu0 %289
  %292 = vst.msk [vmem:[#allocation2] sm:$0xff] %vm189, %v290
  %v293 = vsel %vm189, %v290, 0
  %295 = vmatprep.subr.mxu0 0.0
  %296 = vmatpush1.msra.mxu0 0.0
  %297 = vmatprep.subr.mxu0 0.0
  %298 = vmatpush1.msra.mxu0 0.0
  %299 = vmatprep.subr.mxu0 0.0
  %300 = vmatpush1.msra.mxu0 0.0
  %301 = vmatprep.subr.mxu0 0.0
  %302 = vmatpush1.msra.mxu0 0.0
  %303 = vmatprep.subr.mxu0 0.0
  %304 = vmatpush1.msra.mxu0 0.0
  %305 = vmatprep.subr.mxu0 0.0
  %306 = vmatpush1.msra.mxu0 0.0
  %307 = vmatprep.subr.mxu0 0.0
  %308 = vmatpush1.msra.mxu0 0.0
  %309 = vmatprep.subr.mxu0 0.0
  %310 = vmatpush1.msra.mxu0 0.0
  %311 = vmatprep.subr.mxu0 0.0
  %312 = vmatpush1.msra.mxu0 0.0
  %313 = vmatprep.subr.mxu0 0.0
  %314 = vmatpush1.msra.mxu0 0.0
  %315 = vmatprep.subr.mxu0 0.0
  %316 = vmatpush1.msra.mxu0 0.0
  %317 = vmatprep.subr.mxu0 0.0
  %318 = vmatpush1.msra.mxu0 0.0
  %319 = vmatprep.subr.mxu0 0.0
  %320 = vmatpush1.msra.mxu0 %v43
  %321 = vmatprep.subr.mxu0 0.0
  %322 = vmatpush1.msra.mxu0 %v42
  %323 = vmatprep.subr.mxu0 0.0
  %324 = vmatpush1.msra.mxu0 %v41
  %325 = vmatprep.subr.mxu0 0.0
  %326 = vmatpush1.msra.mxu0 %v40
  %327 = vmatprep.subr.mxu0 0.0
  %328 = vmatpush2.msra.mxu0 0.0
  %329 = vmatprep.subr.mxu0 0.0
  %330 = vmatpush2.msra.mxu0 0.0
  %331 = vmatprep.subr.mxu0 0.0
  %332 = vmatpush2.msra.mxu0 0.0
  %333 = vmatprep.subr.mxu0 0.0
  %334 = vmatpush2.msra.mxu0 0.0
  %335 = vmatprep.subr.mxu0 0.0
  %336 = vmatpush2.msra.mxu0 0.0
  %337 = vmatprep.subr.mxu0 0.0
  %338 = vmatpush2.msra.mxu0 0.0
  %339 = vmatprep.subr.mxu0 0.0
  %340 = vmatpush2.msra.mxu0 0.0
  %341 = vmatprep.subr.mxu0 0.0
  %342 = vmatpush2.msra.mxu0 0.0
  %343 = vmatprep.subr.mxu0 0.0
  %344 = vmatpush2.msra.mxu0 0.0
  %345 = vmatprep.subr.mxu0 0.0
  %346 = vmatpush2.msra.mxu0 0.0
  %347 = vmatprep.subr.mxu0 0.0
  %348 = vmatpush2.msra.mxu0 0.0
  %349 = vmatprep.subr.mxu0 0.0
  %350 = vmatpush2.msra.mxu0 0.0
  %351 = vmatprep.subr.mxu0 0.0
  %352 = vmatpush2.msra.mxu0 0.0
  %353 = vmatprep.subr.mxu0 0.0
  %354 = vmatpush2.msra.mxu0 0.0
  %355 = vmatprep.subr.mxu0 0.0
  %356 = vmatpush2.msra.mxu0 0.0
  %357 = vmatprep.subr.mxu0 0.0
  %358 = vmatpush2.msra.mxu0 0.0
  %359 = vmatprep.mubr.f32.mxu0 0.0
  %360 = vmatmul.mubr.f32.gmra.mxu0 %v293
  %v361 = vpop.f32.mrf.mxu0
  %v362 = vadd.f32 0.0, %v361
  %v363 = vpop.f32.mrf.mxu0
  %364 = vdwg.mxu0
  %v365 = vadd.f32 %v156, %v362
  %v366 = vxor.u32 %v365, 2147483648
  %v367 = vmul.f32 %v366, 1.442695
  %v368 = vpow.pop %v367
  %v369 = vadd.f32 %v368, 1.0
  %v370 = vrcp.pop %v369
  %v371 = vmul.f32 1.0, %v370
  %v372 = vtanh.pop %v365
  %v373 = vmul.f32 %v371, %v281
  %375 = vrot.lane.b32.xlu0 %v372, 32
  %v376 = vpop.permute.xlu0 %375
  %v378 = vmul.f32 %v371, %v376
  %380 = vrot.lane.b32.xlu0 %v378, 32
  %v381 = vpop.permute.xlu0 %380
  %v383 = vadd.f32 %v373, %v381
  %v384 = vtanh.pop %v383
  %386 = vrot.lane.b32.xlu0 %v384, 32
  %v387 = vpop.permute.xlu0 %386
  %v389 = vmul.f32 %v371, %v387
  %391 = vrot.lane.b32.xlu0 %v389, 64
  %v392 = vpop.permute.xlu0 %391
  %394 = vst.msk [vmem:[#allocation2 + $0x8] sm:$0xff] %vm189, %v392
  %v395 = vsel %vm189, %v392, 0
  %397 = vmatprep.subr.mxu0 0.0
  %398 = vmatpush1.msra.mxu0 0.0
  %399 = vmatprep.subr.mxu0 0.0
  %400 = vmatpush1.msra.mxu0 0.0
  %401 = vmatprep.subr.mxu0 0.0
  %402 = vmatpush1.msra.mxu0 0.0
  %403 = vmatprep.subr.mxu0 0.0
  %404 = vmatpush1.msra.mxu0 0.0
  %405 = vmatprep.subr.mxu0 0.0
  %406 = vmatpush1.msra.mxu0 0.0
  %407 = vmatprep.subr.mxu0 0.0
  %408 = vmatpush1.msra.mxu0 0.0
  %409 = vmatprep.subr.mxu0 0.0
  %410 = vmatpush1.msra.mxu0 0.0
  %411 = vmatprep.subr.mxu0 0.0
  %412 = vmatpush1.msra.mxu0 0.0
  %413 = vmatprep.subr.mxu0 0.0
  %414 = vmatpush1.msra.mxu0 0.0
  %415 = vmatprep.subr.mxu0 0.0
  %416 = vmatpush1.msra.mxu0 0.0
  %417 = vmatprep.subr.mxu0 0.0
  %418 = vmatpush1.msra.mxu0 0.0
  %419 = vmatprep.subr.mxu0 0.0
  %420 = vmatpush1.msra.mxu0 0.0
  %421 = vmatprep.subr.mxu0 0.0
  %422 = vmatpush1.msra.mxu0 %v43
  %423 = vmatprep.subr.mxu0 0.0
  %424 = vmatpush1.msra.mxu0 %v42
  %425 = vmatprep.subr.mxu0 0.0
  %426 = vmatpush1.msra.mxu0 %v41
  %427 = vmatprep.subr.mxu0 0.0
  %428 = vmatpush1.msra.mxu0 %v40
  %429 = vmatprep.subr.mxu0 0.0
  %430 = vmatpush2.msra.mxu0 0.0
  %431 = vmatprep.subr.mxu0 0.0
  %432 = vmatpush2.msra.mxu0 0.0
  %433 = vmatprep.subr.mxu0 0.0
  %434 = vmatpush2.msra.mxu0 0.0
  %435 = vmatprep.subr.mxu0 0.0
  %436 = vmatpush2.msra.mxu0 0.0
  %437 = vmatprep.subr.mxu0 0.0
  %438 = vmatpush2.msra.mxu0 0.0
  %439 = vmatprep.subr.mxu0 0.0
  %440 = vmatpush2.msra.mxu0 0.0
  %441 = vmatprep.subr.mxu0 0.0
  %442 = vmatpush2.msra.mxu0 0.0
  %443 = vmatprep.subr.mxu0 0.0
  %444 = vmatpush2.msra.mxu0 0.0
  %445 = vmatprep.subr.mxu0 0.0
  %446 = vmatpush2.msra.mxu0 0.0
  %447 = vmatprep.subr.mxu0 0.0
  %448 = vmatpush2.msra.mxu0 0.0
  %449 = vmatprep.subr.mxu0 0.0
  %450 = vmatpush2.msra.mxu0 0.0
  %451 = vmatprep.subr.mxu0 0.0
  %452 = vmatpush2.msra.mxu0 0.0
  %453 = vmatprep.subr.mxu0 0.0
  %454 = vmatpush2.msra.mxu0 0.0
  %455 = vmatprep.subr.mxu0 0.0
  %456 = vmatpush2.msra.mxu0 0.0
  %457 = vmatprep.subr.mxu0 0.0
  %458 = vmatpush2.msra.mxu0 0.0
  %459 = vmatprep.subr.mxu0 0.0
  %460 = vmatpush2.msra.mxu0 0.0
  %461 = vmatprep.mubr.f32.mxu0 0.0
  %462 = vmatmul.mubr.f32.gmra.mxu0 %v395
  %v463 = vpop.f32.mrf.mxu0
  %v464 = vadd.f32 0.0, %v463
  %v465 = vpop.f32.mrf.mxu0
  %466 = vdwg.mxu0
  %v467 = vadd.f32 %v161, %v464
  %v468 = vxor.u32 %v467, 2147483648
  %v469 = vmul.f32 %v468, 1.442695
  %v470 = vpow.pop %v469
  %v471 = vadd.f32 %v470, 1.0
  %v472 = vrcp.pop %v471
  %v473 = vmul.f32 1.0, %v472
  %v474 = vtanh.pop %v467
  %v475 = vmul.f32 %v473, %v383
  %477 = vrot.lane.b32.xlu0 %v474, 32
  %v478 = vpop.permute.xlu0 %477
  %v480 = vmul.f32 %v473, %v478
  %482 = vrot.lane.b32.xlu0 %v480, 32
  %v483 = vpop.permute.xlu0 %482
  %v485 = vadd.f32 %v475, %v483
  %v486 = vtanh.pop %v485
  %488 = vrot.lane.b32.xlu0 %v486, 32
  %v489 = vpop.permute.xlu0 %488
  %v491 = vmul.f32 %v473, %v489
  %493 = vrot.lane.b32.xlu0 %v491, 64
  %v494 = vpop.permute.xlu0 %493
  %496 = vst.msk [vmem:[#allocation2 + $0x10] sm:$0xff] %vm189, %v494
  %v497 = vsel %vm189, %v494, 0
  %499 = vmatprep.subr.mxu0 0.0
  %500 = vmatpush1.msra.mxu0 0.0
  %501 = vmatprep.subr.mxu0 0.0
  %502 = vmatpush1.msra.mxu0 0.0
  %503 = vmatprep.subr.mxu0 0.0
  %504 = vmatpush1.msra.mxu0 0.0
  %505 = vmatprep.subr.mxu0 0.0
  %506 = vmatpush1.msra.mxu0 0.0
  %507 = vmatprep.subr.mxu0 0.0
  %508 = vmatpush1.msra.mxu0 0.0
  %509 = vmatprep.subr.mxu0 0.0
  %510 = vmatpush1.msra.mxu0 0.0
  %511 = vmatprep.subr.mxu0 0.0
  %512 = vmatpush1.msra.mxu0 0.0
  %513 = vmatprep.subr.mxu0 0.0
  %514 = vmatpush1.msra.mxu0 0.0
  %515 = vmatprep.subr.mxu0 0.0
  %516 = vmatpush1.msra.mxu0 0.0
  %517 = vmatprep.subr.mxu0 0.0
  %518 = vmatpush1.msra.mxu0 0.0
  %519 = vmatprep.subr.mxu0 0.0
  %520 = vmatpush1.msra.mxu0 0.0
  %521 = vmatprep.subr.mxu0 0.0
  %522 = vmatpush1.msra.mxu0 0.0
  %523 = vmatprep.subr.mxu0 0.0
  %524 = vmatpush1.msra.mxu0 %v43
  %525 = vmatprep.subr.mxu0 0.0
  %526 = vmatpush1.msra.mxu0 %v42
  %527 = vmatprep.subr.mxu0 0.0
  %528 = vmatpush1.msra.mxu0 %v41
  %529 = vmatprep.subr.mxu0 0.0
  %530 = vmatpush1.msra.mxu0 %v40
  %531 = vmatprep.subr.mxu0 0.0
  %532 = vmatpush2.msra.mxu0 0.0
  %533 = vmatprep.subr.mxu0 0.0
  %534 = vmatpush2.msra.mxu0 0.0
  %535 = vmatprep.subr.mxu0 0.0
  %536 = vmatpush2.msra.mxu0 0.0
  %537 = vmatprep.subr.mxu0 0.0
  %538 = vmatpush2.msra.mxu0 0.0
  %539 = vmatprep.subr.mxu0 0.0
  %540 = vmatpush2.msra.mxu0 0.0
  %541 = vmatprep.subr.mxu0 0.0
  %542 = vmatpush2.msra.mxu0 0.0
  %543 = vmatprep.subr.mxu0 0.0
  %544 = vmatpush2.msra.mxu0 0.0
  %545 = vmatprep.subr.mxu0 0.0
  %546 = vmatpush2.msra.mxu0 0.0
  %547 = vmatprep.subr.mxu0 0.0
  %548 = vmatpush2.msra.mxu0 0.0
  %549 = vmatprep.subr.mxu0 0.0
  %550 = vmatpush2.msra.mxu0 0.0
  %551 = vmatprep.subr.mxu0 0.0
  %552 = vmatpush2.msra.mxu0 0.0
  %553 = vmatprep.subr.mxu0 0.0
  %554 = vmatpush2.msra.mxu0 0.0
  %555 = vmatprep.subr.mxu0 0.0
  %556 = vmatpush2.msra.mxu0 0.0
  %557 = vmatprep.subr.mxu0 0.0
  %558 = vmatpush2.msra.mxu0 0.0
  %559 = vmatprep.subr.mxu0 0.0
  %560 = vmatpush2.msra.mxu0 0.0
  %561 = vmatprep.subr.mxu0 0.0
  %562 = vmatpush2.msra.mxu0 0.0
  %563 = vmatprep.mubr.f32.mxu0 0.0
  %564 = vmatmul.mubr.f32.gmra.mxu0 %v497
  %v565 = vpop.f32.mrf.mxu0
  %v566 = vadd.f32 0.0, %v565
  %v567 = vpop.f32.mrf.mxu0
  %568 = vdwg.mxu0
  %v569 = vadd.f32 %v166, %v566
  %v570 = vxor.u32 %v569, 2147483648
  %v571 = vmul.f32 %v570, 1.442695
  %v572 = vpow.pop %v571
  %v573 = vadd.f32 %v572, 1.0
  %v574 = vrcp.pop %v573
  %v575 = vmul.f32 1.0, %v574
  %v576 = vtanh.pop %v569
  %v577 = vmul.f32 %v575, %v485
  %579 = vrot.lane.b32.xlu0 %v576, 32
  %v580 = vpop.permute.xlu0 %579
  %v582 = vmul.f32 %v575, %v580
  %584 = vrot.lane.b32.xlu0 %v582, 32
  %v585 = vpop.permute.xlu0 %584
  %v587 = vadd.f32 %v577, %v585
  %v588 = vtanh.pop %v587
  %590 = vrot.lane.b32.xlu0 %v588, 32
  %v591 = vpop.permute.xlu0 %590
  %v593 = vmul.f32 %v575, %v591
  %595 = vrot.lane.b32.xlu0 %v593, 64
  %v596 = vpop.permute.xlu0 %595
  %598 = vst.msk [vmem:[#allocation2 + $0x18] sm:$0xff] %vm189, %v596
  %v599 = vsel %vm189, %v596, 0
  %601 = vmatprep.subr.mxu0 0.0
  %602 = vmatpush1.msra.mxu0 0.0
  %603 = vmatprep.subr.mxu0 0.0
  %604 = vmatpush1.msra.mxu0 0.0
  %605 = vmatprep.subr.mxu0 0.0
  %606 = vmatpush1.msra.mxu0 0.0
  %607 = vmatprep.subr.mxu0 0.0
  %608 = vmatpush1.msra.mxu0 0.0
  %609 = vmatprep.subr.mxu0 0.0
  %610 = vmatpush1.msra.mxu0 0.0
  %611 = vmatprep.subr.mxu0 0.0
  %612 = vmatpush1.msra.mxu0 0.0
  %613 = vmatprep.subr.mxu0 0.0
  %614 = vmatpush1.msra.mxu0 0.0
  %615 = vmatprep.subr.mxu0 0.0
  %616 = vmatpush1.msra.mxu0 0.0
  %617 = vmatprep.subr.mxu0 0.0
  %618 = vmatpush1.msra.mxu0 0.0
  %619 = vmatprep.subr.mxu0 0.0
  %620 = vmatpush1.msra.mxu0 0.0
  %621 = vmatprep.subr.mxu0 0.0
  %622 = vmatpush1.msra.mxu0 0.0
  %623 = vmatprep.subr.mxu0 0.0
  %624 = vmatpush1.msra.mxu0 0.0
  %625 = vmatprep.subr.mxu0 0.0
  %626 = vmatpush1.msra.mxu0 %v43
  %627 = vmatprep.subr.mxu0 0.0
  %628 = vmatpush1.msra.mxu0 %v42
  %629 = vmatprep.subr.mxu0 0.0
  %630 = vmatpush1.msra.mxu0 %v41
  %631 = vmatprep.subr.mxu0 0.0
  %632 = vmatpush1.msra.mxu0 %v40
  %633 = vmatprep.subr.mxu0 0.0
  %634 = vmatpush2.msra.mxu0 0.0
  %635 = vmatprep.subr.mxu0 0.0
  %636 = vmatpush2.msra.mxu0 0.0
  %637 = vmatprep.subr.mxu0 0.0
  %638 = vmatpush2.msra.mxu0 0.0
  %639 = vmatprep.subr.mxu0 0.0
  %640 = vmatpush2.msra.mxu0 0.0
  %641 = vmatprep.subr.mxu0 0.0
  %642 = vmatpush2.msra.mxu0 0.0
  %643 = vmatprep.subr.mxu0 0.0
  %644 = vmatpush2.msra.mxu0 0.0
  %645 = vmatprep.subr.mxu0 0.0
  %646 = vmatpush2.msra.mxu0 0.0
  %647 = vmatprep.subr.mxu0 0.0
  %648 = vmatpush2.msra.mxu0 0.0
  %649 = vmatprep.subr.mxu0 0.0
  %650 = vmatpush2.msra.mxu0 0.0
  %651 = vmatprep.subr.mxu0 0.0
  %652 = vmatpush2.msra.mxu0 0.0
  %653 = vmatprep.subr.mxu0 0.0
  %654 = vmatpush2.msra.mxu0 0.0
  %655 = vmatprep.subr.mxu0 0.0
  %656 = vmatpush2.msra.mxu0 0.0
  %657 = vmatprep.subr.mxu0 0.0
  %658 = vmatpush2.msra.mxu0 0.0
  %659 = vmatprep.subr.mxu0 0.0
  %660 = vmatpush2.msra.mxu0 0.0
  %661 = vmatprep.subr.mxu0 0.0
  %662 = vmatpush2.msra.mxu0 0.0
  %663 = vmatprep.subr.mxu0 0.0
  %664 = vmatpush2.msra.mxu0 0.0
  %665 = vmatprep.mubr.f32.mxu0 0.0
  %666 = vmatmul.mubr.f32.gmra.mxu0 %v599
  %v667 = vpop.f32.mrf.mxu0
  %v668 = vadd.f32 0.0, %v667
  %v669 = vpop.f32.mrf.mxu0
  %670 = vdwg.mxu0
  %v671 = vadd.f32 %v171, %v668
  %v672 = vxor.u32 %v671, 2147483648
  %v673 = vmul.f32 %v672, 1.442695
  %v674 = vpow.pop %v673
  %v675 = vadd.f32 %v674, 1.0
  %v676 = vrcp.pop %v675
  %v677 = vmul.f32 1.0, %v676
  %v678 = vtanh.pop %v671
  %v679 = vmul.f32 %v677, %v587
  %681 = vrot.lane.b32.xlu0 %v678, 32
  %v682 = vpop.permute.xlu0 %681
  %v684 = vmul.f32 %v677, %v682
  %686 = vrot.lane.b32.xlu0 %v684, 32
  %v687 = vpop.permute.xlu0 %686
  %v689 = vadd.f32 %v679, %v687
  %v690 = vtanh.pop %v689
  %692 = vrot.lane.b32.xlu0 %v690, 32
  %v693 = vpop.permute.xlu0 %692
  %v695 = vmul.f32 %v677, %v693
  %697 = vrot.lane.b32.xlu0 %v695, 64
  %v698 = vpop.permute.xlu0 %697
  %700 = vst.msk [vmem:[#allocation2 + $0x20] sm:$0xff] %vm189, %v698
  %v701 = vsel %vm189, %v698, 0
  %703 = vmatprep.subr.mxu0 0.0
  %704 = vmatpush1.msra.mxu0 0.0
  %705 = vmatprep.subr.mxu0 0.0
  %706 = vmatpush1.msra.mxu0 0.0
  %707 = vmatprep.subr.mxu0 0.0
  %708 = vmatpush1.msra.mxu0 0.0
  %709 = vmatprep.subr.mxu0 0.0
  %710 = vmatpush1.msra.mxu0 0.0
  %711 = vmatprep.subr.mxu0 0.0
  %712 = vmatpush1.msra.mxu0 0.0
  %713 = vmatprep.subr.mxu0 0.0
  %714 = vmatpush1.msra.mxu0 0.0
  %715 = vmatprep.subr.mxu0 0.0
  %716 = vmatpush1.msra.mxu0 0.0
  %717 = vmatprep.subr.mxu0 0.0
  %718 = vmatpush1.msra.mxu0 0.0
  %719 = vmatprep.subr.mxu0 0.0
  %720 = vmatpush1.msra.mxu0 0.0
  %721 = vmatprep.subr.mxu0 0.0
  %722 = vmatpush1.msra.mxu0 0.0
  %723 = vmatprep.subr.mxu0 0.0
  %724 = vmatpush1.msra.mxu0 0.0
  %725 = vmatprep.subr.mxu0 0.0
  %726 = vmatpush1.msra.mxu0 0.0
  %727 = vmatprep.subr.mxu0 0.0
  %728 = vmatpush1.msra.mxu0 %v43
  %729 = vmatprep.subr.mxu0 0.0
  %730 = vmatpush1.msra.mxu0 %v42
  %731 = vmatprep.subr.mxu0 0.0
  %732 = vmatpush1.msra.mxu0 %v41
  %733 = vmatprep.subr.mxu0 0.0
  %734 = vmatpush1.msra.mxu0 %v40
  %735 = vmatprep.subr.mxu0 0.0
  %736 = vmatpush2.msra.mxu0 0.0
  %737 = vmatprep.subr.mxu0 0.0
  %738 = vmatpush2.msra.mxu0 0.0
  %739 = vmatprep.subr.mxu0 0.0
  %740 = vmatpush2.msra.mxu0 0.0
  %741 = vmatprep.subr.mxu0 0.0
  %742 = vmatpush2.msra.mxu0 0.0
  %743 = vmatprep.subr.mxu0 0.0
  %744 = vmatpush2.msra.mxu0 0.0
  %745 = vmatprep.subr.mxu0 0.0
  %746 = vmatpush2.msra.mxu0 0.0
  %747 = vmatprep.subr.mxu0 0.0
  %748 = vmatpush2.msra.mxu0 0.0
  %749 = vmatprep.subr.mxu0 0.0
  %750 = vmatpush2.msra.mxu0 0.0
  %751 = vmatprep.subr.mxu0 0.0
  %752 = vmatpush2.msra.mxu0 0.0
  %753 = vmatprep.subr.mxu0 0.0
  %754 = vmatpush2.msra.mxu0 0.0
  %755 = vmatprep.subr.mxu0 0.0
  %756 = vmatpush2.msra.mxu0 0.0
  %757 = vmatprep.subr.mxu0 0.0
  %758 = vmatpush2.msra.mxu0 0.0
  %759 = vmatprep.subr.mxu0 0.0
  %760 = vmatpush2.msra.mxu0 0.0
  %761 = vmatprep.subr.mxu0 0.0
  %762 = vmatpush2.msra.mxu0 0.0
  %763 = vmatprep.subr.mxu0 0.0
  %764 = vmatpush2.msra.mxu0 0.0
  %765 = vmatprep.subr.mxu0 0.0
  %766 = vmatpush2.msra.mxu0 0.0
  %767 = vmatprep.mubr.f32.mxu0 0.0
  %768 = vmatmul.mubr.f32.gmra.mxu0 %v701
  %v769 = vpop.f32.mrf.mxu0
  %v770 = vadd.f32 0.0, %v769
  %v771 = vpop.f32.mrf.mxu0
  %772 = vdwg.mxu0
  %v773 = vadd.f32 %v176, %v770
  %v774 = vxor.u32 %v773, 2147483648
  %v775 = vmul.f32 %v774, 1.442695
  %v776 = vpow.pop %v775
  %v777 = vadd.f32 %v776, 1.0
  %v778 = vrcp.pop %v777
  %v779 = vmul.f32 1.0, %v778
  %v780 = vtanh.pop %v773
  %v781 = vmul.f32 %v779, %v689
  %783 = vrot.lane.b32.xlu0 %v780, 32
  %v784 = vpop.permute.xlu0 %783
  %v786 = vmul.f32 %v779, %v784
  %788 = vrot.lane.b32.xlu0 %v786, 32
  %v789 = vpop.permute.xlu0 %788
  %v791 = vadd.f32 %v781, %v789
  %v792 = vtanh.pop %v791
  %794 = vrot.lane.b32.xlu0 %v792, 32
  %v795 = vpop.permute.xlu0 %794
  %v797 = vmul.f32 %v779, %v795
  %799 = vrot.lane.b32.xlu0 %v797, 64
  %v800 = vpop.permute.xlu0 %799
  %802 = vst.msk [vmem:[#allocation2 + $0x28] sm:$0xff] %vm189, %v800
  %v803 = vsel %vm189, %v800, 0
  %805 = vmatprep.subr.mxu0 0.0
  %806 = vmatpush1.msra.mxu0 0.0
  %807 = vmatprep.subr.mxu0 0.0
  %808 = vmatpush1.msra.mxu0 0.0
  %809 = vmatprep.subr.mxu0 0.0
  %810 = vmatpush1.msra.mxu0 0.0
  %811 = vmatprep.subr.mxu0 0.0
  %812 = vmatpush1.msra.mxu0 0.0
  %813 = vmatprep.subr.mxu0 0.0
  %814 = vmatpush1.msra.mxu0 0.0
  %815 = vmatprep.subr.mxu0 0.0
  %816 = vmatpush1.msra.mxu0 0.0
  %817 = vmatprep.subr.mxu0 0.0
  %818 = vmatpush1.msra.mxu0 0.0
  %819 = vmatprep.subr.mxu0 0.0
  %820 = vmatpush1.msra.mxu0 0.0
  %821 = vmatprep.subr.mxu0 0.0
  %822 = vmatpush1.msra.mxu0 0.0
  %823 = vmatprep.subr.mxu0 0.0
  %824 = vmatpush1.msra.mxu0 0.0
  %825 = vmatprep.subr.mxu0 0.0
  %826 = vmatpush1.msra.mxu0 0.0
  %827 = vmatprep.subr.mxu0 0.0
  %828 = vmatpush1.msra.mxu0 0.0
  %829 = vmatprep.subr.mxu0 0.0
  %830 = vmatpush1.msra.mxu0 %v43
  %831 = vmatprep.subr.mxu0 0.0
  %832 = vmatpush1.msra.mxu0 %v42
  %833 = vmatprep.subr.mxu0 0.0
  %834 = vmatpush1.msra.mxu0 %v41
  %835 = vmatprep.subr.mxu0 0.0
  %836 = vmatpush1.msra.mxu0 %v40
  %837 = vmatprep.subr.mxu0 0.0
  %838 = vmatpush2.msra.mxu0 0.0
  %839 = vmatprep.subr.mxu0 0.0
  %840 = vmatpush2.msra.mxu0 0.0
  %841 = vmatprep.subr.mxu0 0.0
  %842 = vmatpush2.msra.mxu0 0.0
  %843 = vmatprep.subr.mxu0 0.0
  %844 = vmatpush2.msra.mxu0 0.0
  %845 = vmatprep.subr.mxu0 0.0
  %846 = vmatpush2.msra.mxu0 0.0
  %847 = vmatprep.subr.mxu0 0.0
  %848 = vmatpush2.msra.mxu0 0.0
  %849 = vmatprep.subr.mxu0 0.0
  %850 = vmatpush2.msra.mxu0 0.0
  %851 = vmatprep.subr.mxu0 0.0
  %852 = vmatpush2.msra.mxu0 0.0
  %853 = vmatprep.subr.mxu0 0.0
  %854 = vmatpush2.msra.mxu0 0.0
  %855 = vmatprep.subr.mxu0 0.0
  %856 = vmatpush2.msra.mxu0 0.0
  %857 = vmatprep.subr.mxu0 0.0
  %858 = vmatpush2.msra.mxu0 0.0
  %859 = vmatprep.subr.mxu0 0.0
  %860 = vmatpush2.msra.mxu0 0.0
  %861 = vmatprep.subr.mxu0 0.0
  %862 = vmatpush2.msra.mxu0 0.0
  %863 = vmatprep.subr.mxu0 0.0
  %864 = vmatpush2.msra.mxu0 0.0
  %865 = vmatprep.subr.mxu0 0.0
  %866 = vmatpush2.msra.mxu0 0.0
  %867 = vmatprep.subr.mxu0 0.0
  %868 = vmatpush2.msra.mxu0 0.0
  %869 = vmatprep.mubr.f32.mxu0 0.0
  %870 = vmatmul.mubr.f32.gmra.mxu0 %v803
  %v871 = vpop.f32.mrf.mxu0
  %v872 = vadd.f32 0.0, %v871
  %v873 = vpop.f32.mrf.mxu0
  %874 = vdwg.mxu0
  %v875 = vadd.f32 %v181, %v872
  %v876 = vxor.u32 %v875, 2147483648
  %v877 = vmul.f32 %v876, 1.442695
  %v878 = vpow.pop %v877
  %v879 = vadd.f32 %v878, 1.0
  %v880 = vrcp.pop %v879
  %v881 = vmul.f32 1.0, %v880
  %v882 = vtanh.pop %v875
  %v883 = vmul.f32 %v881, %v791
  %885 = vrot.lane.b32.xlu0 %v882, 32
  %v886 = vpop.permute.xlu0 %885
  %v888 = vmul.f32 %v881, %v886
  %890 = vrot.lane.b32.xlu0 %v888, 32
  %v891 = vpop.permute.xlu0 %890
  %v893 = vadd.f32 %v883, %v891
  %v894 = vtanh.pop %v893
  %896 = vrot.lane.b32.xlu0 %v894, 32
  %v897 = vpop.permute.xlu0 %896
  %v899 = vmul.f32 %v881, %v897
  %901 = vrot.lane.b32.xlu0 %v899, 64
  %v902 = vpop.permute.xlu0 %901
  %904 = vst.msk [vmem:[#allocation2 + $0x30] sm:$0xff] %vm189, %v902
  %v905 = vsel %vm189, %v902, 0
  %907 = vmatprep.subr.mxu0 0.0
  %908 = vmatpush1.msra.mxu0 0.0
  %909 = vmatprep.subr.mxu0 0.0
  %910 = vmatpush1.msra.mxu0 0.0
  %911 = vmatprep.subr.mxu0 0.0
  %912 = vmatpush1.msra.mxu0 0.0
  %913 = vmatprep.subr.mxu0 0.0
  %914 = vmatpush1.msra.mxu0 0.0
  %915 = vmatprep.subr.mxu0 0.0
  %916 = vmatpush1.msra.mxu0 0.0
  %917 = vmatprep.subr.mxu0 0.0
  %918 = vmatpush1.msra.mxu0 0.0
  %919 = vmatprep.subr.mxu0 0.0
  %920 = vmatpush1.msra.mxu0 0.0
  %921 = vmatprep.subr.mxu0 0.0
  %922 = vmatpush1.msra.mxu0 0.0
  %923 = vmatprep.subr.mxu0 0.0
  %924 = vmatpush1.msra.mxu0 0.0
  %925 = vmatprep.subr.mxu0 0.0
  %926 = vmatpush1.msra.mxu0 0.0
  %927 = vmatprep.subr.mxu0 0.0
  %928 = vmatpush1.msra.mxu0 0.0
  %929 = vmatprep.subr.mxu0 0.0
  %930 = vmatpush1.msra.mxu0 0.0
  %931 = vmatprep.subr.mxu0 0.0
  %932 = vmatpush1.msra.mxu0 %v43
  %933 = vmatprep.subr.mxu0 0.0
  %934 = vmatpush1.msra.mxu0 %v42
  %935 = vmatprep.subr.mxu0 0.0
  %936 = vmatpush1.msra.mxu0 %v41
  %937 = vmatprep.subr.mxu0 0.0
  %938 = vmatpush1.msra.mxu0 %v40
  %939 = vmatprep.subr.mxu0 0.0
  %940 = vmatpush2.msra.mxu0 0.0
  %941 = vmatprep.subr.mxu0 0.0
  %942 = vmatpush2.msra.mxu0 0.0
  %943 = vmatprep.subr.mxu0 0.0
  %944 = vmatpush2.msra.mxu0 0.0
  %945 = vmatprep.subr.mxu0 0.0
  %946 = vmatpush2.msra.mxu0 0.0
  %947 = vmatprep.subr.mxu0 0.0
  %948 = vmatpush2.msra.mxu0 0.0
  %949 = vmatprep.subr.mxu0 0.0
  %950 = vmatpush2.msra.mxu0 0.0
  %951 = vmatprep.subr.mxu0 0.0
  %952 = vmatpush2.msra.mxu0 0.0
  %953 = vmatprep.subr.mxu0 0.0
  %954 = vmatpush2.msra.mxu0 0.0
  %955 = vmatprep.subr.mxu0 0.0
  %956 = vmatpush2.msra.mxu0 0.0
  %957 = vmatprep.subr.mxu0 0.0
  %958 = vmatpush2.msra.mxu0 0.0
  %959 = vmatprep.subr.mxu0 0.0
  %960 = vmatpush2.msra.mxu0 0.0
  %961 = vmatprep.subr.mxu0 0.0
  %962 = vmatpush2.msra.mxu0 0.0
  %963 = vmatprep.subr.mxu0 0.0
  %964 = vmatpush2.msra.mxu0 0.0
  %965 = vmatprep.subr.mxu0 0.0
  %966 = vmatpush2.msra.mxu0 0.0
  %967 = vmatprep.subr.mxu0 0.0
  %968 = vmatpush2.msra.mxu0 0.0
  %969 = vmatprep.subr.mxu0 0.0
  %970 = vmatpush2.msra.mxu0 0.0
  %971 = vmatprep.mubr.f32.mxu0 0.0
  %972 = vmatmul.mubr.f32.gmra.mxu0 %v905
  %v973 = vpop.f32.mrf.mxu0
  %v974 = vadd.f32 0.0, %v973
  %v975 = vpop.f32.mrf.mxu0
  %976 = vdwg.mxu0
  %v977 = vadd.f32 %v186, %v974
  %v978 = vxor.u32 %v977, 2147483648
  %v979 = vmul.f32 %v978, 1.442695
  %v980 = vpow.pop %v979
  %v981 = vadd.f32 %v980, 1.0
  %v982 = vrcp.pop %v981
  %v983 = vmul.f32 1.0, %v982
  %v984 = vtanh.pop %v977
  %v985 = vmul.f32 %v983, %v893
  %987 = vrot.lane.b32.xlu0 %v984, 32
  %v988 = vpop.permute.xlu0 %987
  %v990 = vmul.f32 %v983, %v988
  %992 = vrot.lane.b32.xlu0 %v990, 32
  %v993 = vpop.permute.xlu0 %992
  %v995 = vadd.f32 %v985, %v993
  %v996 = vtanh.pop %v995
  %998 = vrot.lane.b32.xlu0 %v996, 32
  %v999 = vpop.permute.xlu0 %998
  %v1001 = vmul.f32 %v983, %v999
  %1003 = vrot.lane.b32.xlu0 %v1001, 64
  %v1004 = vpop.permute.xlu0 %1003
  %1006 = vst.msk [vmem:[#allocation2 + $0x38] sm:$0xff] %vm189, %v1004
  %v1007 = vld [vmem:[%s4] sm:$0xff]
  %v1008 = vld [vmem:[%s4 + $0x8] sm:$0xff]
  %v1009 = vld [vmem:[%s4 + $0x10] sm:$0xff]
  %v1010 = vld [vmem:[%s4 + $0x18] sm:$0xff]
  %v1011 = vld [vmem:[%s5] sm:$0xff]
  %v1012 = vld [vmem:[%s5 + $0x8] sm:$0xff]
  %v1013 = vld [vmem:[%s5 + $0x10] sm:$0xff]
  %v1014 = vld [vmem:[%s5 + $0x18] sm:$0xff]
  %v1015 = vld [vmem:[%s6] sm:$0x1]
  %v1016 = vld [vmem:[#allocation2] sm:$0xff]
  %v1017 = vld [vmem:[#allocation2 + $0x8] sm:$0xff]
  %v1018 = vld [vmem:[#allocation2 + $0x10] sm:$0xff]
  %v1019 = vld [vmem:[#allocation2 + $0x18] sm:$0xff]
  %v1020 = vld [vmem:[#allocation2 + $0x20] sm:$0xff]
  %v1021 = vld [vmem:[#allocation2 + $0x28] sm:$0xff]
  %v1022 = vld [vmem:[#allocation2 + $0x30] sm:$0xff]
  %v1023 = vld [vmem:[#allocation2 + $0x38] sm:$0xff]
  %v1025 = vlaneseq
  %v1026 = vshrl.u32 %v1025, 7
  %v1027 = vsub.s32 0, %v1026
  %v1028 = vrot.slane %v1015, %v1027
  %v1031 = vsel %vm189, %v1016, 0
  %v1034 = vsel %vm189, %v1017, 0
  %v1037 = vsel %vm189, %v1018, 0
  %v1040 = vsel %vm189, %v1019, 0
  %v1043 = vsel %vm189, %v1020, 0
  %v1046 = vsel %vm189, %v1021, 0
  %v1049 = vsel %vm189, %v1022, 0
  %v1052 = vsel %vm189, %v1023, 0
  %1054 = vmatprep.subr.mxu0 0.0
  %1055 = vmatpush1.msra.mxu0 0.0
  %1056 = vmatprep.subr.mxu0 0.0
  %1057 = vmatpush1.msra.mxu0 0.0
  %1058 = vmatprep.subr.mxu0 0.0
  %1059 = vmatpush1.msra.mxu0 0.0
  %1060 = vmatprep.subr.mxu0 0.0
  %1061 = vmatpush1.msra.mxu0 0.0
  %1062 = vmatprep.subr.mxu0 0.0
  %1063 = vmatpush1.msra.mxu0 0.0
  %1064 = vmatprep.subr.mxu0 0.0
  %1065 = vmatpush1.msra.mxu0 0.0
  %1066 = vmatprep.subr.mxu0 0.0
  %1067 = vmatpush1.msra.mxu0 0.0
  %1068 = vmatprep.subr.mxu0 0.0
  %1069 = vmatpush1.msra.mxu0 0.0
  %1070 = vmatprep.subr.mxu0 0.0
  %1071 = vmatpush1.msra.mxu0 0.0
  %1072 = vmatprep.subr.mxu0 0.0
  %1073 = vmatpush1.msra.mxu0 0.0
  %1074 = vmatprep.subr.mxu0 0.0
  %1075 = vmatpush1.msra.mxu0 0.0
  %1076 = vmatprep.subr.mxu0 0.0
  %1077 = vmatpush1.msra.mxu0 0.0
  %1078 = vmatprep.subr.mxu0 0.0
  %1079 = vmatpush1.msra.mxu0 %v1010
  %1080 = vmatprep.subr.mxu0 0.0
  %1081 = vmatpush1.msra.mxu0 %v1009
  %1082 = vmatprep.subr.mxu0 0.0
  %1083 = vmatpush1.msra.mxu0 %v1008
  %1084 = vmatprep.subr.mxu0 0.0
  %1085 = vmatpush1.msra.mxu0 %v1007
  %1086 = vmatprep.subr.mxu0 0.0
  %1087 = vmatpush2.msra.mxu0 0.0
  %1088 = vmatprep.subr.mxu0 0.0
  %1089 = vmatpush2.msra.mxu0 0.0
  %1090 = vmatprep.subr.mxu0 0.0
  %1091 = vmatpush2.msra.mxu0 0.0
  %1092 = vmatprep.subr.mxu0 0.0
  %1093 = vmatpush2.msra.mxu0 0.0
  %1094 = vmatprep.subr.mxu0 0.0
  %1095 = vmatpush2.msra.mxu0 0.0
  %1096 = vmatprep.subr.mxu0 0.0
  %1097 = vmatpush2.msra.mxu0 0.0
  %1098 = vmatprep.subr.mxu0 0.0
  %1099 = vmatpush2.msra.mxu0 0.0
  %1100 = vmatprep.subr.mxu0 0.0
  %1101 = vmatpush2.msra.mxu0 0.0
  %1102 = vmatprep.subr.mxu0 0.0
  %1103 = vmatpush2.msra.mxu0 0.0
  %1104 = vmatprep.subr.mxu0 0.0
  %1105 = vmatpush2.msra.mxu0 0.0
  %1106 = vmatprep.subr.mxu0 0.0
  %1107 = vmatpush2.msra.mxu0 0.0
  %1108 = vmatprep.subr.mxu0 0.0
  %1109 = vmatpush2.msra.mxu0 0.0
  %1110 = vmatprep.subr.mxu0 0.0
  %1111 = vmatpush2.msra.mxu0 0.0
  %1112 = vmatprep.subr.mxu0 0.0
  %1113 = vmatpush2.msra.mxu0 0.0
  %1114 = vmatprep.subr.mxu0 0.0
  %1115 = vmatpush2.msra.mxu0 0.0
  %1116 = vmatprep.subr.mxu0 0.0
  %1117 = vmatpush2.msra.mxu0 0.0
  %1118 = vmatprep.mubr.f32.mxu0 0.0
  %1119 = vmatmul.mubr.f32.gmra.mxu0 %v1031
  %v1120 = vpop.f32.mrf.mxu0
  %v1121 = vadd.f32 %v1028, %v1120
  %v1122 = vpop.f32.mrf.mxu0
  %1123 = vmatprep.mubr.f32.mxu0 0.0
  %1124 = vmatmul.mubr.f32.gmra.mxu0 %v1034
  %v1125 = vpop.f32.mrf.mxu0
  %v1126 = vadd.f32 %v1028, %v1125
  %v1127 = vpop.f32.mrf.mxu0
  %1128 = vmatprep.mubr.f32.mxu0 0.0
  %1129 = vmatmul.mubr.f32.gmra.mxu0 %v1037
  %v1130 = vpop.f32.mrf.mxu0
  %v1131 = vadd.f32 %v1028, %v1130
  %v1132 = vpop.f32.mrf.mxu0
  %1133 = vmatprep.mubr.f32.mxu0 0.0
  %1134 = vmatmul.mubr.f32.gmra.mxu0 %v1040
  %v1135 = vpop.f32.mrf.mxu0
  %v1136 = vadd.f32 %v1028, %v1135
  %v1137 = vpop.f32.mrf.mxu0
  %1138 = vmatprep.mubr.f32.mxu0 0.0
  %1139 = vmatmul.mubr.f32.gmra.mxu0 %v1043
  %v1140 = vpop.f32.mrf.mxu0
  %v1141 = vadd.f32 %v1028, %v1140
  %v1142 = vpop.f32.mrf.mxu0
  %1143 = vmatprep.mubr.f32.mxu0 0.0
  %1144 = vmatmul.mubr.f32.gmra.mxu0 %v1046
  %v1145 = vpop.f32.mrf.mxu0
  %v1146 = vadd.f32 %v1028, %v1145
  %v1147 = vpop.f32.mrf.mxu0
  %1148 = vmatprep.mubr.f32.mxu0 0.0
  %1149 = vmatmul.mubr.f32.gmra.mxu0 %v1049
  %v1150 = vpop.f32.mrf.mxu0
  %v1151 = vadd.f32 %v1028, %v1150
  %v1152 = vpop.f32.mrf.mxu0
  %1153 = vmatprep.mubr.f32.mxu0 0.0
  %1154 = vmatmul.mubr.f32.gmra.mxu0 %v1052
  %v1155 = vpop.f32.mrf.mxu0
  %v1156 = vadd.f32 %v1028, %v1155
  %v1157 = vpop.f32.mrf.mxu0
  %1158 = vdwg.mxu0
  %1159 = vmatprep.subr.mxu0 0.0
  %1160 = vmatpush1.msra.mxu0 0.0
  %1161 = vmatprep.subr.mxu0 0.0
  %1162 = vmatpush1.msra.mxu0 0.0
  %1163 = vmatprep.subr.mxu0 0.0
  %1164 = vmatpush1.msra.mxu0 0.0
  %1165 = vmatprep.subr.mxu0 0.0
  %1166 = vmatpush1.msra.mxu0 0.0
  %1167 = vmatprep.subr.mxu0 0.0
  %1168 = vmatpush1.msra.mxu0 0.0
  %1169 = vmatprep.subr.mxu0 0.0
  %1170 = vmatpush1.msra.mxu0 0.0
  %1171 = vmatprep.subr.mxu0 0.0
  %1172 = vmatpush1.msra.mxu0 0.0
  %1173 = vmatprep.subr.mxu0 0.0
  %1174 = vmatpush1.msra.mxu0 0.0
  %1175 = vmatprep.subr.mxu0 0.0
  %1176 = vmatpush1.msra.mxu0 0.0
  %1177 = vmatprep.subr.mxu0 0.0
  %1178 = vmatpush1.msra.mxu0 0.0
  %1179 = vmatprep.subr.mxu0 0.0
  %1180 = vmatpush1.msra.mxu0 0.0
  %1181 = vmatprep.subr.mxu0 0.0
  %1182 = vmatpush1.msra.mxu0 0.0
  %1183 = vmatprep.subr.mxu0 0.0
  %1184 = vmatpush1.msra.mxu0 %v1014
  %1185 = vmatprep.subr.mxu0 0.0
  %1186 = vmatpush1.msra.mxu0 %v1013
  %1187 = vmatprep.subr.mxu0 0.0
  %1188 = vmatpush1.msra.mxu0 %v1012
  %1189 = vmatprep.subr.mxu0 0.0
  %1190 = vmatpush1.msra.mxu0 %v1011
  %1191 = vmatprep.subr.mxu0 0.0
  %1192 = vmatpush2.msra.mxu0 0.0
  %1193 = vmatprep.subr.mxu0 0.0
  %1194 = vmatpush2.msra.mxu0 0.0
  %1195 = vmatprep.subr.mxu0 0.0
  %1196 = vmatpush2.msra.mxu0 0.0
  %1197 = vmatprep.subr.mxu0 0.0
  %1198 = vmatpush2.msra.mxu0 0.0
  %1199 = vmatprep.subr.mxu0 0.0
  %1200 = vmatpush2.msra.mxu0 0.0
  %1201 = vmatprep.subr.mxu0 0.0
  %1202 = vmatpush2.msra.mxu0 0.0
  %1203 = vmatprep.subr.mxu0 0.0
  %1204 = vmatpush2.msra.mxu0 0.0
  %1205 = vmatprep.subr.mxu0 0.0
  %1206 = vmatpush2.msra.mxu0 0.0
  %1207 = vmatprep.subr.mxu0 0.0
  %1208 = vmatpush2.msra.mxu0 0.0
  %1209 = vmatprep.subr.mxu0 0.0
  %1210 = vmatpush2.msra.mxu0 0.0
  %1211 = vmatprep.subr.mxu0 0.0
  %1212 = vmatpush2.msra.mxu0 0.0
  %1213 = vmatprep.subr.mxu0 0.0
  %1214 = vmatpush2.msra.mxu0 0.0
  %1215 = vmatprep.subr.mxu0 0.0
  %1216 = vmatpush2.msra.mxu0 0.0
  %1217 = vmatprep.subr.mxu0 0.0
  %1218 = vmatpush2.msra.mxu0 0.0
  %1219 = vmatprep.subr.mxu0 0.0
  %1220 = vmatpush2.msra.mxu0 0.0
  %1221 = vmatprep.subr.mxu0 0.0
  %1222 = vmatpush2.msra.mxu0 0.0
  %1223 = vmatprep.mubr.f32.mxu0 0.0
  %1224 = vmatmul.mubr.f32.gmra.mxu0 %v191
  %v1225 = vpop.f32.mrf.mxu0
  %v1226 = vadd.f32 0.0, %v1225
  %v1227 = vpop.f32.mrf.mxu0
  %1228 = vdwg.mxu0
  %v1229 = vadd.f32 %v1121, %v1226
  %v1230 = vxor.u32 %v1229, 2147483648
  %v1231 = vmul.f32 %v1230, 1.442695
  %v1232 = vpow.pop %v1231
  %v1233 = vadd.f32 %v1232, 1.0
  %v1234 = vrcp.pop %v1233
  %v1235 = vmul.f32 1.0, %v1234
  %v1236 = vtanh.pop %v1229
  %v1237 = vmul.f32 %v1235, 0.0
  %1239 = vrot.lane.b32.xlu0 %v1236, 32
  %v1240 = vpop.permute.xlu0 %1239
  %v1242 = vmul.f32 %v1235, %v1240
  %1244 = vrot.lane.b32.xlu0 %v1242, 32
  %v1245 = vpop.permute.xlu0 %1244
  %v1247 = vadd.f32 %v1237, %v1245
  %v1248 = vtanh.pop %v1247
  %1250 = vrot.lane.b32.xlu0 %v1248, 32
  %v1251 = vpop.permute.xlu0 %1250
  %v1253 = vmul.f32 %v1235, %v1251
  %1255 = vrot.lane.b32.xlu0 %v1253, 64
  %v1256 = vpop.permute.xlu0 %1255
  %v1257 = vsel %vm189, %v1256, 0
  %1259 = vmatprep.subr.mxu0 0.0
  %1260 = vmatpush1.msra.mxu0 0.0
  %1261 = vmatprep.subr.mxu0 0.0
  %1262 = vmatpush1.msra.mxu0 0.0
  %1263 = vmatprep.subr.mxu0 0.0
  %1264 = vmatpush1.msra.mxu0 0.0
  %1265 = vmatprep.subr.mxu0 0.0
  %1266 = vmatpush1.msra.mxu0 0.0
  %1267 = vmatprep.subr.mxu0 0.0
  %1268 = vmatpush1.msra.mxu0 0.0
  %1269 = vmatprep.subr.mxu0 0.0
  %1270 = vmatpush1.msra.mxu0 0.0
  %1271 = vmatprep.subr.mxu0 0.0
  %1272 = vmatpush1.msra.mxu0 0.0
  %1273 = vmatprep.subr.mxu0 0.0
  %1274 = vmatpush1.msra.mxu0 0.0
  %1275 = vmatprep.subr.mxu0 0.0
  %1276 = vmatpush1.msra.mxu0 0.0
  %1277 = vmatprep.subr.mxu0 0.0
  %1278 = vmatpush1.msra.mxu0 0.0
  %1279 = vmatprep.subr.mxu0 0.0
  %1280 = vmatpush1.msra.mxu0 0.0
  %1281 = vmatprep.subr.mxu0 0.0
  %1282 = vmatpush1.msra.mxu0 0.0
  %1283 = vmatprep.subr.mxu0 0.0
  %1284 = vmatpush1.msra.mxu0 %v1014
  %1285 = vmatprep.subr.mxu0 0.0
  %1286 = vmatpush1.msra.mxu0 %v1013
  %1287 = vmatprep.subr.mxu0 0.0
  %1288 = vmatpush1.msra.mxu0 %v1012
  %1289 = vmatprep.subr.mxu0 0.0
  %1290 = vmatpush1.msra.mxu0 %v1011
  %1291 = vmatprep.subr.mxu0 0.0
  %1292 = vmatpush2.msra.mxu0 0.0
  %1293 = vmatprep.subr.mxu0 0.0
  %1294 = vmatpush2.msra.mxu0 0.0
  %1295 = vmatprep.subr.mxu0 0.0
  %1296 = vmatpush2.msra.mxu0 0.0
  %1297 = vmatprep.subr.mxu0 0.0
  %1298 = vmatpush2.msra.mxu0 0.0
  %1299 = vmatprep.subr.mxu0 0.0
  %1300 = vmatpush2.msra.mxu0 0.0
  %1301 = vmatprep.subr.mxu0 0.0
  %1302 = vmatpush2.msra.mxu0 0.0
  %1303 = vmatprep.subr.mxu0 0.0
  %1304 = vmatpush2.msra.mxu0 0.0
  %1305 = vmatprep.subr.mxu0 0.0
  %1306 = vmatpush2.msra.mxu0 0.0
  %1307 = vmatprep.subr.mxu0 0.0
  %1308 = vmatpush2.msra.mxu0 0.0
  %1309 = vmatprep.subr.mxu0 0.0
  %1310 = vmatpush2.msra.mxu0 0.0
  %1311 = vmatprep.subr.mxu0 0.0
  %1312 = vmatpush2.msra.mxu0 0.0
  %1313 = vmatprep.subr.mxu0 0.0
  %1314 = vmatpush2.msra.mxu0 0.0
  %1315 = vmatprep.subr.mxu0 0.0
  %1316 = vmatpush2.msra.mxu0 0.0
  %1317 = vmatprep.subr.mxu0 0.0
  %1318 = vmatpush2.msra.mxu0 0.0
  %1319 = vmatprep.subr.mxu0 0.0
  %1320 = vmatpush2.msra.mxu0 0.0
  %1321 = vmatprep.subr.mxu0 0.0
  %1322 = vmatpush2.msra.mxu0 0.0
  %1323 = vmatprep.mubr.f32.mxu0 0.0
  %1324 = vmatmul.mubr.f32.gmra.mxu0 %v1257
  %v1325 = vpop.f32.mrf.mxu0
  %v1326 = vadd.f32 0.0, %v1325
  %v1327 = vpop.f32.mrf.mxu0
  %1328 = vdwg.mxu0
  %v1329 = vadd.f32 %v1126, %v1326
  %v1330 = vxor.u32 %v1329, 2147483648
  %v1331 = vmul.f32 %v1330, 1.442695
  %v1332 = vpow.pop %v1331
  %v1333 = vadd.f32 %v1332, 1.0
  %v1334 = vrcp.pop %v1333
  %v1335 = vmul.f32 1.0, %v1334
  %v1336 = vtanh.pop %v1329
  %v1337 = vmul.f32 %v1335, %v1247
  %1339 = vrot.lane.b32.xlu0 %v1336, 32
  %v1340 = vpop.permute.xlu0 %1339
  %v1342 = vmul.f32 %v1335, %v1340
  %1344 = vrot.lane.b32.xlu0 %v1342, 32
  %v1345 = vpop.permute.xlu0 %1344
  %v1347 = vadd.f32 %v1337, %v1345
  %v1348 = vtanh.pop %v1347
  %1350 = vrot.lane.b32.xlu0 %v1348, 32
  %v1351 = vpop.permute.xlu0 %1350
  %v1353 = vmul.f32 %v1335, %v1351
  %1355 = vrot.lane.b32.xlu0 %v1353, 64
  %v1356 = vpop.permute.xlu0 %1355
  %v1357 = vsel %vm189, %v1356, 0
  %1359 = vmatprep.subr.mxu0 0.0
  %1360 = vmatpush1.msra.mxu0 0.0
  %1361 = vmatprep.subr.mxu0 0.0
  %1362 = vmatpush1.msra.mxu0 0.0
  %1363 = vmatprep.subr.mxu0 0.0
  %1364 = vmatpush1.msra.mxu0 0.0
  %1365 = vmatprep.subr.mxu0 0.0
  %1366 = vmatpush1.msra.mxu0 0.0
  %1367 = vmatprep.subr.mxu0 0.0
  %1368 = vmatpush1.msra.mxu0 0.0
  %1369 = vmatprep.subr.mxu0 0.0
  %1370 = vmatpush1.msra.mxu0 0.0
  %1371 = vmatprep.subr.mxu0 0.0
  %1372 = vmatpush1.msra.mxu0 0.0
  %1373 = vmatprep.subr.mxu0 0.0
  %1374 = vmatpush1.msra.mxu0 0.0
  %1375 = vmatprep.subr.mxu0 0.0
  %1376 = vmatpush1.msra.mxu0 0.0
  %1377 = vmatprep.subr.mxu0 0.0
  %1378 = vmatpush1.msra.mxu0 0.0
  %1379 = vmatprep.subr.mxu0 0.0
  %1380 = vmatpush1.msra.mxu0 0.0
  %1381 = vmatprep.subr.mxu0 0.0
  %1382 = vmatpush1.msra.mxu0 0.0
  %1383 = vmatprep.subr.mxu0 0.0
  %1384 = vmatpush1.msra.mxu0 %v1014
  %1385 = vmatprep.subr.mxu0 0.0
  %1386 = vmatpush1.msra.mxu0 %v1013
  %1387 = vmatprep.subr.mxu0 0.0
  %1388 = vmatpush1.msra.mxu0 %v1012
  %1389 = vmatprep.subr.mxu0 0.0
  %1390 = vmatpush1.msra.mxu0 %v1011
  %1391 = vmatprep.subr.mxu0 0.0
  %1392 = vmatpush2.msra.mxu0 0.0
  %1393 = vmatprep.subr.mxu0 0.0
  %1394 = vmatpush2.msra.mxu0 0.0
  %1395 = vmatprep.subr.mxu0 0.0
  %1396 = vmatpush2.msra.mxu0 0.0
  %1397 = vmatprep.subr.mxu0 0.0
  %1398 = vmatpush2.msra.mxu0 0.0
  %1399 = vmatprep.subr.mxu0 0.0
  %1400 = vmatpush2.msra.mxu0 0.0
  %1401 = vmatprep.subr.mxu0 0.0
  %1402 = vmatpush2.msra.mxu0 0.0
  %1403 = vmatprep.subr.mxu0 0.0
  %1404 = vmatpush2.msra.mxu0 0.0
  %1405 = vmatprep.subr.mxu0 0.0
  %1406 = vmatpush2.msra.mxu0 0.0
  %1407 = vmatprep.subr.mxu0 0.0
  %1408 = vmatpush2.msra.mxu0 0.0
  %1409 = vmatprep.subr.mxu0 0.0
  %1410 = vmatpush2.msra.mxu0 0.0
  %1411 = vmatprep.subr.mxu0 0.0
  %1412 = vmatpush2.msra.mxu0 0.0
  %1413 = vmatprep.subr.mxu0 0.0
  %1414 = vmatpush2.msra.mxu0 0.0
  %1415 = vmatprep.subr.mxu0 0.0
  %1416 = vmatpush2.msra.mxu0 0.0
  %1417 = vmatprep.subr.mxu0 0.0
  %1418 = vmatpush2.msra.mxu0 0.0
  %1419 = vmatprep.subr.mxu0 0.0
  %1420 = vmatpush2.msra.mxu0 0.0
  %1421 = vmatprep.subr.mxu0 0.0
  %1422 = vmatpush2.msra.mxu0 0.0
  %1423 = vmatprep.mubr.f32.mxu0 0.0
  %1424 = vmatmul.mubr.f32.gmra.mxu0 %v1357
  %v1425 = vpop.f32.mrf.mxu0
  %v1426 = vadd.f32 0.0, %v1425
  %v1427 = vpop.f32.mrf.mxu0
  %1428 = vdwg.mxu0
  %v1429 = vadd.f32 %v1131, %v1426
  %v1430 = vxor.u32 %v1429, 2147483648
  %v1431 = vmul.f32 %v1430, 1.442695
  %v1432 = vpow.pop %v1431
  %v1433 = vadd.f32 %v1432, 1.0
  %v1434 = vrcp.pop %v1433
  %v1435 = vmul.f32 1.0, %v1434
  %v1436 = vtanh.pop %v1429
  %v1437 = vmul.f32 %v1435, %v1347
  %1439 = vrot.lane.b32.xlu0 %v1436, 32
  %v1440 = vpop.permute.xlu0 %1439
  %v1442 = vmul.f32 %v1435, %v1440
  %1444 = vrot.lane.b32.xlu0 %v1442, 32
  %v1445 = vpop.permute.xlu0 %1444
  %v1447 = vadd.f32 %v1437, %v1445
  %v1448 = vtanh.pop %v1447
  %1450 = vrot.lane.b32.xlu0 %v1448, 32
  %v1451 = vpop.permute.xlu0 %1450
  %v1453 = vmul.f32 %v1435, %v1451
  %1455 = vrot.lane.b32.xlu0 %v1453, 64
  %v1456 = vpop.permute.xlu0 %1455
  %v1457 = vsel %vm189, %v1456, 0
  %1459 = vmatprep.subr.mxu0 0.0
  %1460 = vmatpush1.msra.mxu0 0.0
  %1461 = vmatprep.subr.mxu0 0.0
  %1462 = vmatpush1.msra.mxu0 0.0
  %1463 = vmatprep.subr.mxu0 0.0
  %1464 = vmatpush1.msra.mxu0 0.0
  %1465 = vmatprep.subr.mxu0 0.0
  %1466 = vmatpush1.msra.mxu0 0.0
  %1467 = vmatprep.subr.mxu0 0.0
  %1468 = vmatpush1.msra.mxu0 0.0
  %1469 = vmatprep.subr.mxu0 0.0
  %1470 = vmatpush1.msra.mxu0 0.0
  %1471 = vmatprep.subr.mxu0 0.0
  %1472 = vmatpush1.msra.mxu0 0.0
  %1473 = vmatprep.subr.mxu0 0.0
  %1474 = vmatpush1.msra.mxu0 0.0
  %1475 = vmatprep.subr.mxu0 0.0
  %1476 = vmatpush1.msra.mxu0 0.0
  %1477 = vmatprep.subr.mxu0 0.0
  %1478 = vmatpush1.msra.mxu0 0.0
  %1479 = vmatprep.subr.mxu0 0.0
  %1480 = vmatpush1.msra.mxu0 0.0
  %1481 = vmatprep.subr.mxu0 0.0
  %1482 = vmatpush1.msra.mxu0 0.0
  %1483 = vmatprep.subr.mxu0 0.0
  %1484 = vmatpush1.msra.mxu0 %v1014
  %1485 = vmatprep.subr.mxu0 0.0
  %1486 = vmatpush1.msra.mxu0 %v1013
  %1487 = vmatprep.subr.mxu0 0.0
  %1488 = vmatpush1.msra.mxu0 %v1012
  %1489 = vmatprep.subr.mxu0 0.0
  %1490 = vmatpush1.msra.mxu0 %v1011
  %1491 = vmatprep.subr.mxu0 0.0
  %1492 = vmatpush2.msra.mxu0 0.0
  %1493 = vmatprep.subr.mxu0 0.0
  %1494 = vmatpush2.msra.mxu0 0.0
  %1495 = vmatprep.subr.mxu0 0.0
  %1496 = vmatpush2.msra.mxu0 0.0
  %1497 = vmatprep.subr.mxu0 0.0
  %1498 = vmatpush2.msra.mxu0 0.0
  %1499 = vmatprep.subr.mxu0 0.0
  %1500 = vmatpush2.msra.mxu0 0.0
  %1501 = vmatprep.subr.mxu0 0.0
  %1502 = vmatpush2.msra.mxu0 0.0
  %1503 = vmatprep.subr.mxu0 0.0
  %1504 = vmatpush2.msra.mxu0 0.0
  %1505 = vmatprep.subr.mxu0 0.0
  %1506 = vmatpush2.msra.mxu0 0.0
  %1507 = vmatprep.subr.mxu0 0.0
  %1508 = vmatpush2.msra.mxu0 0.0
  %1509 = vmatprep.subr.mxu0 0.0
  %1510 = vmatpush2.msra.mxu0 0.0
  %1511 = vmatprep.subr.mxu0 0.0
  %1512 = vmatpush2.msra.mxu0 0.0
  %1513 = vmatprep.subr.mxu0 0.0
  %1514 = vmatpush2.msra.mxu0 0.0
  %1515 = vmatprep.subr.mxu0 0.0
  %1516 = vmatpush2.msra.mxu0 0.0
  %1517 = vmatprep.subr.mxu0 0.0
  %1518 = vmatpush2.msra.mxu0 0.0
  %1519 = vmatprep.subr.mxu0 0.0
  %1520 = vmatpush2.msra.mxu0 0.0
  %1521 = vmatprep.subr.mxu0 0.0
  %1522 = vmatpush2.msra.mxu0 0.0
  %1523 = vmatprep.mubr.f32.mxu0 0.0
  %1524 = vmatmul.mubr.f32.gmra.mxu0 %v1457
  %v1525 = vpop.f32.mrf.mxu0
  %v1526 = vadd.f32 0.0, %v1525
  %v1527 = vpop.f32.mrf.mxu0
  %1528 = vdwg.mxu0
  %v1529 = vadd.f32 %v1136, %v1526
  %v1530 = vxor.u32 %v1529, 2147483648
  %v1531 = vmul.f32 %v1530, 1.442695
  %v1532 = vpow.pop %v1531
  %v1533 = vadd.f32 %v1532, 1.0
  %v1534 = vrcp.pop %v1533
  %v1535 = vmul.f32 1.0, %v1534
  %v1536 = vtanh.pop %v1529
  %v1537 = vmul.f32 %v1535, %v1447
  %1539 = vrot.lane.b32.xlu0 %v1536, 32
  %v1540 = vpop.permute.xlu0 %1539
  %v1542 = vmul.f32 %v1535, %v1540
  %1544 = vrot.lane.b32.xlu0 %v1542, 32
  %v1545 = vpop.permute.xlu0 %1544
  %v1547 = vadd.f32 %v1537, %v1545
  %v1548 = vtanh.pop %v1547
  %1550 = vrot.lane.b32.xlu0 %v1548, 32
  %v1551 = vpop.permute.xlu0 %1550
  %v1553 = vmul.f32 %v1535, %v1551
  %1555 = vrot.lane.b32.xlu0 %v1553, 64
  %v1556 = vpop.permute.xlu0 %1555
  %v1557 = vsel %vm189, %v1556, 0
  %1559 = vmatprep.subr.mxu0 0.0
  %1560 = vmatpush1.msra.mxu0 0.0
  %1561 = vmatprep.subr.mxu0 0.0
  %1562 = vmatpush1.msra.mxu0 0.0
  %1563 = vmatprep.subr.mxu0 0.0
  %1564 = vmatpush1.msra.mxu0 0.0
  %1565 = vmatprep.subr.mxu0 0.0
  %1566 = vmatpush1.msra.mxu0 0.0
  %1567 = vmatprep.subr.mxu0 0.0
  %1568 = vmatpush1.msra.mxu0 0.0
  %1569 = vmatprep.subr.mxu0 0.0
  %1570 = vmatpush1.msra.mxu0 0.0
  %1571 = vmatprep.subr.mxu0 0.0
  %1572 = vmatpush1.msra.mxu0 0.0
  %1573 = vmatprep.subr.mxu0 0.0
  %1574 = vmatpush1.msra.mxu0 0.0
  %1575 = vmatprep.subr.mxu0 0.0
  %1576 = vmatpush1.msra.mxu0 0.0
  %1577 = vmatprep.subr.mxu0 0.0
  %1578 = vmatpush1.msra.mxu0 0.0
  %1579 = vmatprep.subr.mxu0 0.0
  %1580 = vmatpush1.msra.mxu0 0.0
  %1581 = vmatprep.subr.mxu0 0.0
  %1582 = vmatpush1.msra.mxu0 0.0
  %1583 = vmatprep.subr.mxu0 0.0
  %1584 = vmatpush1.msra.mxu0 %v1014
  %1585 = vmatprep.subr.mxu0 0.0
  %1586 = vmatpush1.msra.mxu0 %v1013
  %1587 = vmatprep.subr.mxu0 0.0
  %1588 = vmatpush1.msra.mxu0 %v1012
  %1589 = vmatprep.subr.mxu0 0.0
  %1590 = vmatpush1.msra.mxu0 %v1011
  %1591 = vmatprep.subr.mxu0 0.0
  %1592 = vmatpush2.msra.mxu0 0.0
  %1593 = vmatprep.subr.mxu0 0.0
  %1594 = vmatpush2.msra.mxu0 0.0
  %1595 = vmatprep.subr.mxu0 0.0
  %1596 = vmatpush2.msra.mxu0 0.0
  %1597 = vmatprep.subr.mxu0 0.0
  %1598 = vmatpush2.msra.mxu0 0.0
  %1599 = vmatprep.subr.mxu0 0.0
  %1600 = vmatpush2.msra.mxu0 0.0
  %1601 = vmatprep.subr.mxu0 0.0
  %1602 = vmatpush2.msra.mxu0 0.0
  %1603 = vmatprep.subr.mxu0 0.0
  %1604 = vmatpush2.msra.mxu0 0.0
  %1605 = vmatprep.subr.mxu0 0.0
  %1606 = vmatpush2.msra.mxu0 0.0
  %1607 = vmatprep.subr.mxu0 0.0
  %1608 = vmatpush2.msra.mxu0 0.0
  %1609 = vmatprep.subr.mxu0 0.0
  %1610 = vmatpush2.msra.mxu0 0.0
  %1611 = vmatprep.subr.mxu0 0.0
  %1612 = vmatpush2.msra.mxu0 0.0
  %1613 = vmatprep.subr.mxu0 0.0
  %1614 = vmatpush2.msra.mxu0 0.0
  %1615 = vmatprep.subr.mxu0 0.0
  %1616 = vmatpush2.msra.mxu0 0.0
  %1617 = vmatprep.subr.mxu0 0.0
  %1618 = vmatpush2.msra.mxu0 0.0
  %1619 = vmatprep.subr.mxu0 0.0
  %1620 = vmatpush2.msra.mxu0 0.0
  %1621 = vmatprep.subr.mxu0 0.0
  %1622 = vmatpush2.msra.mxu0 0.0
  %1623 = vmatprep.mubr.f32.mxu0 0.0
  %1624 = vmatmul.mubr.f32.gmra.mxu0 %v1557
  %v1625 = vpop.f32.mrf.mxu0
  %v1626 = vadd.f32 0.0, %v1625
  %v1627 = vpop.f32.mrf.mxu0
  %1628 = vdwg.mxu0
  %v1629 = vadd.f32 %v1141, %v1626
  %v1630 = vxor.u32 %v1629, 2147483648
  %v1631 = vmul.f32 %v1630, 1.442695
  %v1632 = vpow.pop %v1631
  %v1633 = vadd.f32 %v1632, 1.0
  %v1634 = vrcp.pop %v1633
  %v1635 = vmul.f32 1.0, %v1634
  %v1636 = vtanh.pop %v1629
  %v1637 = vmul.f32 %v1635, %v1547
  %1639 = vrot.lane.b32.xlu0 %v1636, 32
  %v1640 = vpop.permute.xlu0 %1639
  %v1642 = vmul.f32 %v1635, %v1640
  %1644 = vrot.lane.b32.xlu0 %v1642, 32
  %v1645 = vpop.permute.xlu0 %1644
  %v1647 = vadd.f32 %v1637, %v1645
  %v1648 = vtanh.pop %v1647
  %1650 = vrot.lane.b32.xlu0 %v1648, 32
  %v1651 = vpop.permute.xlu0 %1650
  %v1653 = vmul.f32 %v1635, %v1651
  %1655 = vrot.lane.b32.xlu0 %v1653, 64
  %v1656 = vpop.permute.xlu0 %1655
  %v1657 = vsel %vm189, %v1656, 0
  %1659 = vmatprep.subr.mxu0 0.0
  %1660 = vmatpush1.msra.mxu0 0.0
  %1661 = vmatprep.subr.mxu0 0.0
  %1662 = vmatpush1.msra.mxu0 0.0
  %1663 = vmatprep.subr.mxu0 0.0
  %1664 = vmatpush1.msra.mxu0 0.0
  %1665 = vmatprep.subr.mxu0 0.0
  %1666 = vmatpush1.msra.mxu0 0.0
  %1667 = vmatprep.subr.mxu0 0.0
  %1668 = vmatpush1.msra.mxu0 0.0
  %1669 = vmatprep.subr.mxu0 0.0
  %1670 = vmatpush1.msra.mxu0 0.0
  %1671 = vmatprep.subr.mxu0 0.0
  %1672 = vmatpush1.msra.mxu0 0.0
  %1673 = vmatprep.subr.mxu0 0.0
  %1674 = vmatpush1.msra.mxu0 0.0
  %1675 = vmatprep.subr.mxu0 0.0
  %1676 = vmatpush1.msra.mxu0 0.0
  %1677 = vmatprep.subr.mxu0 0.0
  %1678 = vmatpush1.msra.mxu0 0.0
  %1679 = vmatprep.subr.mxu0 0.0
  %1680 = vmatpush1.msra.mxu0 0.0
  %1681 = vmatprep.subr.mxu0 0.0
  %1682 = vmatpush1.msra.mxu0 0.0
  %1683 = vmatprep.subr.mxu0 0.0
  %1684 = vmatpush1.msra.mxu0 %v1014
  %1685 = vmatprep.subr.mxu0 0.0
  %1686 = vmatpush1.msra.mxu0 %v1013
  %1687 = vmatprep.subr.mxu0 0.0
  %1688 = vmatpush1.msra.mxu0 %v1012
  %1689 = vmatprep.subr.mxu0 0.0
  %1690 = vmatpush1.msra.mxu0 %v1011
  %1691 = vmatprep.subr.mxu0 0.0
  %1692 = vmatpush2.msra.mxu0 0.0
  %1693 = vmatprep.subr.mxu0 0.0
  %1694 = vmatpush2.msra.mxu0 0.0
  %1695 = vmatprep.subr.mxu0 0.0
  %1696 = vmatpush2.msra.mxu0 0.0
  %1697 = vmatprep.subr.mxu0 0.0
  %1698 = vmatpush2.msra.mxu0 0.0
  %1699 = vmatprep.subr.mxu0 0.0
  %1700 = vmatpush2.msra.mxu0 0.0
  %1701 = vmatprep.subr.mxu0 0.0
  %1702 = vmatpush2.msra.mxu0 0.0
  %1703 = vmatprep.subr.mxu0 0.0
  %1704 = vmatpush2.msra.mxu0 0.0
  %1705 = vmatprep.subr.mxu0 0.0
  %1706 = vmatpush2.msra.mxu0 0.0
  %1707 = vmatprep.subr.mxu0 0.0
  %1708 = vmatpush2.msra.mxu0 0.0
  %1709 = vmatprep.subr.mxu0 0.0
  %1710 = vmatpush2.msra.mxu0 0.0
  %1711 = vmatprep.subr.mxu0 0.0
  %1712 = vmatpush2.msra.mxu0 0.0
  %1713 = vmatprep.subr.mxu0 0.0
  %1714 = vmatpush2.msra.mxu0 0.0
  %1715 = vmatprep.subr.mxu0 0.0
  %1716 = vmatpush2.msra.mxu0 0.0
  %1717 = vmatprep.subr.mxu0 0.0
  %1718 = vmatpush2.msra.mxu0 0.0
  %1719 = vmatprep.subr.mxu0 0.0
  %1720 = vmatpush2.msra.mxu0 0.0
  %1721 = vmatprep.subr.mxu0 0.0
  %1722 = vmatpush2.msra.mxu0 0.0
  %1723 = vmatprep.mubr.f32.mxu0 0.0
  %1724 = vmatmul.mubr.f32.gmra.mxu0 %v1657
  %v1725 = vpop.f32.mrf.mxu0
  %v1726 = vadd.f32 0.0, %v1725
  %v1727 = vpop.f32.mrf.mxu0
  %1728 = vdwg.mxu0
  %v1729 = vadd.f32 %v1146, %v1726
  %v1730 = vxor.u32 %v1729, 2147483648
  %v1731 = vmul.f32 %v1730, 1.442695
  %v1732 = vpow.pop %v1731
  %v1733 = vadd.f32 %v1732, 1.0
  %v1734 = vrcp.pop %v1733
  %v1735 = vmul.f32 1.0, %v1734
  %v1736 = vtanh.pop %v1729
  %v1737 = vmul.f32 %v1735, %v1647
  %1739 = vrot.lane.b32.xlu0 %v1736, 32
  %v1740 = vpop.permute.xlu0 %1739
  %v1742 = vmul.f32 %v1735, %v1740
  %1744 = vrot.lane.b32.xlu0 %v1742, 32
  %v1745 = vpop.permute.xlu0 %1744
  %v1747 = vadd.f32 %v1737, %v1745
  %v1748 = vtanh.pop %v1747
  %1750 = vrot.lane.b32.xlu0 %v1748, 32
  %v1751 = vpop.permute.xlu0 %1750
  %v1753 = vmul.f32 %v1735, %v1751
  %1755 = vrot.lane.b32.xlu0 %v1753, 64
  %v1756 = vpop.permute.xlu0 %1755
  %v1757 = vsel %vm189, %v1756, 0
  %1759 = vmatprep.subr.mxu0 0.0
  %1760 = vmatpush1.msra.mxu0 0.0
  %1761 = vmatprep.subr.mxu0 0.0
  %1762 = vmatpush1.msra.mxu0 0.0
  %1763 = vmatprep.subr.mxu0 0.0
  %1764 = vmatpush1.msra.mxu0 0.0
  %1765 = vmatprep.subr.mxu0 0.0
  %1766 = vmatpush1.msra.mxu0 0.0
  %1767 = vmatprep.subr.mxu0 0.0
  %1768 = vmatpush1.msra.mxu0 0.0
  %1769 = vmatprep.subr.mxu0 0.0
  %1770 = vmatpush1.msra.mxu0 0.0
  %1771 = vmatprep.subr.mxu0 0.0
  %1772 = vmatpush1.msra.mxu0 0.0
  %1773 = vmatprep.subr.mxu0 0.0
  %1774 = vmatpush1.msra.mxu0 0.0
  %1775 = vmatprep.subr.mxu0 0.0
  %1776 = vmatpush1.msra.mxu0 0.0
  %1777 = vmatprep.subr.mxu0 0.0
  %1778 = vmatpush1.msra.mxu0 0.0
  %1779 = vmatprep.subr.mxu0 0.0
  %1780 = vmatpush1.msra.mxu0 0.0
  %1781 = vmatprep.subr.mxu0 0.0
  %1782 = vmatpush1.msra.mxu0 0.0
  %1783 = vmatprep.subr.mxu0 0.0
  %1784 = vmatpush1.msra.mxu0 %v1014
  %1785 = vmatprep.subr.mxu0 0.0
  %1786 = vmatpush1.msra.mxu0 %v1013
  %1787 = vmatprep.subr.mxu0 0.0
  %1788 = vmatpush1.msra.mxu0 %v1012
  %1789 = vmatprep.subr.mxu0 0.0
  %1790 = vmatpush1.msra.mxu0 %v1011
  %1791 = vmatprep.subr.mxu0 0.0
  %1792 = vmatpush2.msra.mxu0 0.0
  %1793 = vmatprep.subr.mxu0 0.0
  %1794 = vmatpush2.msra.mxu0 0.0
  %1795 = vmatprep.subr.mxu0 0.0
  %1796 = vmatpush2.msra.mxu0 0.0
  %1797 = vmatprep.subr.mxu0 0.0
  %1798 = vmatpush2.msra.mxu0 0.0
  %1799 = vmatprep.subr.mxu0 0.0
  %1800 = vmatpush2.msra.mxu0 0.0
  %1801 = vmatprep.subr.mxu0 0.0
  %1802 = vmatpush2.msra.mxu0 0.0
  %1803 = vmatprep.subr.mxu0 0.0
  %1804 = vmatpush2.msra.mxu0 0.0
  %1805 = vmatprep.subr.mxu0 0.0
  %1806 = vmatpush2.msra.mxu0 0.0
  %1807 = vmatprep.subr.mxu0 0.0
  %1808 = vmatpush2.msra.mxu0 0.0
  %1809 = vmatprep.subr.mxu0 0.0
  %1810 = vmatpush2.msra.mxu0 0.0
  %1811 = vmatprep.subr.mxu0 0.0
  %1812 = vmatpush2.msra.mxu0 0.0
  %1813 = vmatprep.subr.mxu0 0.0
  %1814 = vmatpush2.msra.mxu0 0.0
  %1815 = vmatprep.subr.mxu0 0.0
  %1816 = vmatpush2.msra.mxu0 0.0
  %1817 = vmatprep.subr.mxu0 0.0
  %1818 = vmatpush2.msra.mxu0 0.0
  %1819 = vmatprep.subr.mxu0 0.0
  %1820 = vmatpush2.msra.mxu0 0.0
  %1821 = vmatprep.subr.mxu0 0.0
  %1822 = vmatpush2.msra.mxu0 0.0
  %1823 = vmatprep.mubr.f32.mxu0 0.0
  %1824 = vmatmul.mubr.f32.gmra.mxu0 %v1757
  %v1825 = vpop.f32.mrf.mxu0
  %v1826 = vadd.f32 0.0, %v1825
  %v1827 = vpop.f32.mrf.mxu0
  %1828 = vdwg.mxu0
  %v1829 = vadd.f32 %v1151, %v1826
  %v1830 = vxor.u32 %v1829, 2147483648
  %v1831 = vmul.f32 %v1830, 1.442695
  %v1832 = vpow.pop %v1831
  %v1833 = vadd.f32 %v1832, 1.0
  %v1834 = vrcp.pop %v1833
  %v1835 = vmul.f32 1.0, %v1834
  %v1836 = vtanh.pop %v1829
  %v1837 = vmul.f32 %v1835, %v1747
  %1839 = vrot.lane.b32.xlu0 %v1836, 32
  %v1840 = vpop.permute.xlu0 %1839
  %v1842 = vmul.f32 %v1835, %v1840
  %1844 = vrot.lane.b32.xlu0 %v1842, 32
  %v1845 = vpop.permute.xlu0 %1844
  %v1847 = vadd.f32 %v1837, %v1845
  %v1848 = vtanh.pop %v1847
  %1850 = vrot.lane.b32.xlu0 %v1848, 32
  %v1851 = vpop.permute.xlu0 %1850
  %v1853 = vmul.f32 %v1835, %v1851
  %1855 = vrot.lane.b32.xlu0 %v1853, 64
  %v1856 = vpop.permute.xlu0 %1855
  %v1857 = vsel %vm189, %v1856, 0
  %1859 = vmatprep.subr.mxu0 0.0
  %1860 = vmatpush1.msra.mxu0 0.0
  %1861 = vmatprep.subr.mxu0 0.0
  %1862 = vmatpush1.msra.mxu0 0.0
  %1863 = vmatprep.subr.mxu0 0.0
  %1864 = vmatpush1.msra.mxu0 0.0
  %1865 = vmatprep.subr.mxu0 0.0
  %1866 = vmatpush1.msra.mxu0 0.0
  %1867 = vmatprep.subr.mxu0 0.0
  %1868 = vmatpush1.msra.mxu0 0.0
  %1869 = vmatprep.subr.mxu0 0.0
  %1870 = vmatpush1.msra.mxu0 0.0
  %1871 = vmatprep.subr.mxu0 0.0
  %1872 = vmatpush1.msra.mxu0 0.0
  %1873 = vmatprep.subr.mxu0 0.0
  %1874 = vmatpush1.msra.mxu0 0.0
  %1875 = vmatprep.subr.mxu0 0.0
  %1876 = vmatpush1.msra.mxu0 0.0
  %1877 = vmatprep.subr.mxu0 0.0
  %1878 = vmatpush1.msra.mxu0 0.0
  %1879 = vmatprep.subr.mxu0 0.0
  %1880 = vmatpush1.msra.mxu0 0.0
  %1881 = vmatprep.subr.mxu0 0.0
  %1882 = vmatpush1.msra.mxu0 0.0
  %1883 = vmatprep.subr.mxu0 0.0
  %1884 = vmatpush1.msra.mxu0 %v1014
  %1885 = vmatprep.subr.mxu0 0.0
  %1886 = vmatpush1.msra.mxu0 %v1013
  %1887 = vmatprep.subr.mxu0 0.0
  %1888 = vmatpush1.msra.mxu0 %v1012
  %1889 = vmatprep.subr.mxu0 0.0
  %1890 = vmatpush1.msra.mxu0 %v1011
  %1891 = vmatprep.subr.mxu0 0.0
  %1892 = vmatpush2.msra.mxu0 0.0
  %1893 = vmatprep.subr.mxu0 0.0
  %1894 = vmatpush2.msra.mxu0 0.0
  %1895 = vmatprep.subr.mxu0 0.0
  %1896 = vmatpush2.msra.mxu0 0.0
  %1897 = vmatprep.subr.mxu0 0.0
  %1898 = vmatpush2.msra.mxu0 0.0
  %1899 = vmatprep.subr.mxu0 0.0
  %1900 = vmatpush2.msra.mxu0 0.0
  %1901 = vmatprep.subr.mxu0 0.0
  %1902 = vmatpush2.msra.mxu0 0.0
  %1903 = vmatprep.subr.mxu0 0.0
  %1904 = vmatpush2.msra.mxu0 0.0
  %1905 = vmatprep.subr.mxu0 0.0
  %1906 = vmatpush2.msra.mxu0 0.0
  %1907 = vmatprep.subr.mxu0 0.0
  %1908 = vmatpush2.msra.mxu0 0.0
  %1909 = vmatprep.subr.mxu0 0.0
  %1910 = vmatpush2.msra.mxu0 0.0
  %1911 = vmatprep.subr.mxu0 0.0
  %1912 = vmatpush2.msra.mxu0 0.0
  %1913 = vmatprep.subr.mxu0 0.0
  %1914 = vmatpush2.msra.mxu0 0.0
  %1915 = vmatprep.subr.mxu0 0.0
  %1916 = vmatpush2.msra.mxu0 0.0
  %1917 = vmatprep.subr.mxu0 0.0
  %1918 = vmatpush2.msra.mxu0 0.0
  %1919 = vmatprep.subr.mxu0 0.0
  %1920 = vmatpush2.msra.mxu0 0.0
  %1921 = vmatprep.subr.mxu0 0.0
  %1922 = vmatpush2.msra.mxu0 0.0
  %1923 = vmatprep.mubr.f32.mxu0 0.0
  %1924 = vmatmul.mubr.f32.gmra.mxu0 %v1857
  %v1925 = vpop.f32.mrf.mxu0
  %v1926 = vadd.f32 0.0, %v1925
  %v1927 = vpop.f32.mrf.mxu0
  %1928 = vdwg.mxu0
  %v1929 = vadd.f32 %v1156, %v1926
  %v1930 = vxor.u32 %v1929, 2147483648
  %v1931 = vmul.f32 %v1930, 1.442695
  %v1932 = vpow.pop %v1931
  %v1933 = vadd.f32 %v1932, 1.0
  %v1934 = vrcp.pop %v1933
  %v1935 = vmul.f32 1.0, %v1934
  %v1936 = vtanh.pop %v1929
  %v1937 = vmul.f32 %v1935, %v1847
  %1939 = vrot.lane.b32.xlu0 %v1936, 32
  %v1940 = vpop.permute.xlu0 %1939
  %v1942 = vmul.f32 %v1935, %v1940
  %1944 = vrot.lane.b32.xlu0 %v1942, 32
  %v1945 = vpop.permute.xlu0 %1944
  %v1947 = vadd.f32 %v1937, %v1945
  %v1948 = vtanh.pop %v1947
  %1950 = vrot.lane.b32.xlu0 %v1948, 32
  %v1951 = vpop.permute.xlu0 %1950
  %v1953 = vmul.f32 %v1935, %v1951
  %v1954 = vmax.f32 %v1001, 0.0
  %v1955 = vmax.f32 %v1953, 0.0
  %v1956 = vld [vmem:[%s7] sm:$0xff]
  %v1957 = vld [vmem:[%s7 + $0x8] sm:$0xff]
  %v1958 = vld [vmem:[%s7 + $0x10] sm:$0xff]
  %v1959 = vld [vmem:[%s7 + $0x18] sm:$0xff]
  %v1960 = vld [vmem:[%s8] sm:$0x1]
  %v1962 = vlaneseq
  %v1963 = vshrl.u32 %v1962, 7
  %v1964 = vsub.s32 0, %v1963
  %v1965 = vrot.slane %v1960, %v1964
  %1969 = vrot.lane.b32.xlu0 %v1954, 64
  %v1970 = vpop.permute.xlu0 %1969
  %1971 = vrot.lane.b32.xlu0 %v1955, 64
  %v1972 = vpop.permute.xlu0 %1971
  %v1973 = vsel %vm189, %v1970, 0
  %v1975 = vsel %vm189, %v1972, 0
  %1977 = vmatprep.subr.mxu0 0.0
  %1978 = vmatpush1.msra.mxu0 0.0
  %1979 = vmatprep.subr.mxu0 0.0
  %1980 = vmatpush1.msra.mxu0 0.0
  %1981 = vmatprep.subr.mxu0 0.0
  %1982 = vmatpush1.msra.mxu0 0.0
  %1983 = vmatprep.subr.mxu0 0.0
  %1984 = vmatpush1.msra.mxu0 0.0
  %1985 = vmatprep.subr.mxu0 0.0
  %1986 = vmatpush1.msra.mxu0 0.0
  %1987 = vmatprep.subr.mxu0 0.0
  %1988 = vmatpush1.msra.mxu0 0.0
  %1989 = vmatprep.subr.mxu0 0.0
  %1990 = vmatpush1.msra.mxu0 0.0
  %1991 = vmatprep.subr.mxu0 0.0
  %1992 = vmatpush1.msra.mxu0 0.0
  %1993 = vmatprep.subr.mxu0 0.0
  %1994 = vmatpush1.msra.mxu0 0.0
  %1995 = vmatprep.subr.mxu0 0.0
  %1996 = vmatpush1.msra.mxu0 0.0
  %1997 = vmatprep.subr.mxu0 0.0
  %1998 = vmatpush1.msra.mxu0 0.0
  %1999 = vmatprep.subr.mxu0 0.0
  %2000 = vmatpush1.msra.mxu0 0.0
  %2001 = vmatprep.subr.mxu0 0.0
  %2002 = vmatpush1.msra.mxu0 %v1959
  %2003 = vmatprep.subr.mxu0 0.0
  %2004 = vmatpush1.msra.mxu0 %v1958
  %2005 = vmatprep.subr.mxu0 0.0
  %2006 = vmatpush1.msra.mxu0 %v1957
  %2007 = vmatprep.subr.mxu0 0.0
  %2008 = vmatpush1.msra.mxu0 %v1956
  %2009 = vmatprep.subr.mxu0 0.0
  %2010 = vmatpush2.msra.mxu0 0.0
  %2011 = vmatprep.subr.mxu0 0.0
  %2012 = vmatpush2.msra.mxu0 0.0
  %2013 = vmatprep.subr.mxu0 0.0
  %2014 = vmatpush2.msra.mxu0 0.0
  %2015 = vmatprep.subr.mxu0 0.0
  %2016 = vmatpush2.msra.mxu0 0.0
  %2017 = vmatprep.subr.mxu0 0.0
  %2018 = vmatpush2.msra.mxu0 0.0
  %2019 = vmatprep.subr.mxu0 0.0
  %2020 = vmatpush2.msra.mxu0 0.0
  %2021 = vmatprep.subr.mxu0 0.0
  %2022 = vmatpush2.msra.mxu0 0.0
  %2023 = vmatprep.subr.mxu0 0.0
  %2024 = vmatpush2.msra.mxu0 0.0
  %2025 = vmatprep.subr.mxu0 0.0
  %2026 = vmatpush2.msra.mxu0 0.0
  %2027 = vmatprep.subr.mxu0 0.0
  %2028 = vmatpush2.msra.mxu0 0.0
  %2029 = vmatprep.subr.mxu0 0.0
  %2030 = vmatpush2.msra.mxu0 0.0
  %2031 = vmatprep.subr.mxu0 0.0
  %2032 = vmatpush2.msra.mxu0 0.0
  %2033 = vmatprep.subr.mxu0 0.0
  %2034 = vmatpush2.msra.mxu0 0.0
  %2035 = vmatprep.subr.mxu0 0.0
  %2036 = vmatpush2.msra.mxu0 0.0
  %2037 = vmatprep.subr.mxu0 0.0
  %2038 = vmatpush2.msra.mxu0 0.0
  %2039 = vmatprep.subr.mxu0 0.0
  %2040 = vmatpush2.msra.mxu0 0.0
  %2041 = vmatprep.mubr.f32.mxu0 0.0
  %2042 = vmatmul.mubr.f32.gmra.mxu0 %v1973
  %v2043 = vpop.f32.mrf.mxu0
  %v2044 = vadd.f32 %v1965, %v2043
  %v2045 = vpop.f32.mrf.mxu0
  %2046 = vmatprep.mubr.f32.mxu0 0.0
  %2047 = vmatmul.mubr.f32.gmra.mxu0 %v1975
  %v2048 = vpop.f32.mrf.mxu0
  %v2049 = vadd.f32 %v1965, %v2048
  %v2050 = vpop.f32.mrf.mxu0
  %2051 = vdwg.mxu0
  %v2052 = vmax.f32 %v2044, 0.0
  %v2053 = vmax.f32 %v2049, 0.0
  %v2054 = vld [vmem:[%s9] sm:$0xff]
  %v2055 = vld [vmem:[%s9 + $0x8] sm:$0xff]
  %v2056 = vld [vmem:[%s9 + $0x10] sm:$0xff]
  %v2057 = vld [vmem:[%s9 + $0x18] sm:$0xff]
  %v2058 = vld [vmem:[%s9 + $0x20] sm:$0xff]
  %v2059 = vld [vmem:[%s9 + $0x28] sm:$0xff]
  %v2060 = vld [vmem:[%s9 + $0x30] sm:$0xff]
  %v2061 = vld [vmem:[%s9 + $0x38] sm:$0xff]
  %v2062 = vld [vmem:[%s9 + $0x40] sm:$0xff]
  %v2063 = vld [vmem:[%s9 + $0x48] sm:$0xff]
  %v2064 = vld [vmem:[%s9 + $0x50] sm:$0xff]
  %v2065 = vld [vmem:[%s9 + $0x58] sm:$0xff]
  %v2066 = vld [vmem:[%s9 + $0x60] sm:$0xff]
  %v2067 = vld [vmem:[%s9 + $0x68] sm:$0xff]
  %v2068 = vld [vmem:[%s9 + $0x70] sm:$0xff]
  %v2069 = vld [vmem:[%s9 + $0x78] sm:$0xff]
  %v2070 = vld [vmem:[%s10] sm:$0x1]
  %v2072 = vlaneseq
  %v2073 = vshrl.u32 %v2072, 7
  %v2074 = vsub.s32 0, %v2073
  %v2075 = vrot.slane %v2070, %v2074
  %2077 = vmatprep.subr.mxu0 0.0
  %2078 = vmatpush1.msra.mxu0 %v2069
  %2079 = vmatprep.subr.mxu0 0.0
  %2080 = vmatpush1.msra.mxu0 %v2068
  %2081 = vmatprep.subr.mxu0 0.0
  %2082 = vmatpush1.msra.mxu0 %v2067
  %2083 = vmatprep.subr.mxu0 0.0
  %2084 = vmatpush1.msra.mxu0 %v2066
  %2085 = vmatprep.subr.mxu0 0.0
  %2086 = vmatpush1.msra.mxu0 %v2065
  %2087 = vmatprep.subr.mxu0 0.0
  %2088 = vmatpush1.msra.mxu0 %v2064
  %2089 = vmatprep.subr.mxu0 0.0
  %2090 = vmatpush1.msra.mxu0 %v2063
  %2091 = vmatprep.subr.mxu0 0.0
  %2092 = vmatpush1.msra.mxu0 %v2062
  %2093 = vmatprep.subr.mxu0 0.0
  %2094 = vmatpush1.msra.mxu0 %v2061
  %2095 = vmatprep.subr.mxu0 0.0
  %2096 = vmatpush1.msra.mxu0 %v2060
  %2097 = vmatprep.subr.mxu0 0.0
  %2098 = vmatpush1.msra.mxu0 %v2059
  %2099 = vmatprep.subr.mxu0 0.0
  %2100 = vmatpush1.msra.mxu0 %v2058
  %2101 = vmatprep.subr.mxu0 0.0
  %2102 = vmatpush1.msra.mxu0 %v2057
  %2103 = vmatprep.subr.mxu0 0.0
  %2104 = vmatpush1.msra.mxu0 %v2056
  %2105 = vmatprep.subr.mxu0 0.0
  %2106 = vmatpush1.msra.mxu0 %v2055
  %2107 = vmatprep.subr.mxu0 0.0
  %2108 = vmatpush1.msra.mxu0 %v2054
  %2109 = vmatprep.subr.mxu0 0.0
  %2110 = vmatpush2.msra.mxu0 0.0
  %2111 = vmatprep.subr.mxu0 0.0
  %2112 = vmatpush2.msra.mxu0 0.0
  %2113 = vmatprep.subr.mxu0 0.0
  %2114 = vmatpush2.msra.mxu0 0.0
  %2115 = vmatprep.subr.mxu0 0.0
  %2116 = vmatpush2.msra.mxu0 0.0
  %2117 = vmatprep.subr.mxu0 0.0
  %2118 = vmatpush2.msra.mxu0 0.0
  %2119 = vmatprep.subr.mxu0 0.0
  %2120 = vmatpush2.msra.mxu0 0.0
  %2121 = vmatprep.subr.mxu0 0.0
  %2122 = vmatpush2.msra.mxu0 0.0
  %2123 = vmatprep.subr.mxu0 0.0
  %2124 = vmatpush2.msra.mxu0 0.0
  %2125 = vmatprep.subr.mxu0 0.0
  %2126 = vmatpush2.msra.mxu0 0.0
  %2127 = vmatprep.subr.mxu0 0.0
  %2128 = vmatpush2.msra.mxu0 0.0
  %2129 = vmatprep.subr.mxu0 0.0
  %2130 = vmatpush2.msra.mxu0 0.0
  %2131 = vmatprep.subr.mxu0 0.0
  %2132 = vmatpush2.msra.mxu0 0.0
  %2133 = vmatprep.subr.mxu0 0.0
  %2134 = vmatpush2.msra.mxu0 0.0
  %2135 = vmatprep.subr.mxu0 0.0
  %2136 = vmatpush2.msra.mxu0 0.0
  %2137 = vmatprep.subr.mxu0 0.0
  %2138 = vmatpush2.msra.mxu0 0.0
  %2139 = vmatprep.subr.mxu0 0.0
  %2140 = vmatpush2.msra.mxu0 0.0
  %2141 = vmatprep.mubr.f32.mxu0 0.0
  %2142 = vmatmul.mubr.f32.gmra.mxu0 %v2052
  %v2143 = vpop.f32.mrf.mxu0
  %v2144 = vadd.f32 %v2075, %v2143
  %v2145 = vpop.f32.mrf.mxu0
  %2146 = vmatprep.mubr.f32.mxu0 0.0
  %2147 = vmatmul.mubr.f32.gmra.mxu0 %v2053
  %v2148 = vpop.f32.mrf.mxu0
  %v2149 = vadd.f32 %v2075, %v2148
  %v2150 = vpop.f32.mrf.mxu0
  %2151 = vdwg.mxu0
  %v2152 = vxor.u32 %v2144, 2147483648
  %v2153 = vxor.u32 %v2149, 2147483648
  %v2154 = vmul.f32 %v2152, 1.442695
  %v2155 = vpow.pop %v2154
  %v2156 = vmul.f32 %v2153, 1.442695
  %v2157 = vpow.pop %v2156
  %v2158 = vadd.f32 %v2155, 1.0
  %v2159 = vadd.f32 %v2157, 1.0
  %v2160 = vrcp.pop %v2158
  %v2161 = vmul.f32 1.0, %v2160
  %v2162 = vrcp.pop %v2159
  %v2163 = vmul.f32 1.0, %v2162
  %vm2164 = vcmask 31744
  %2165 = vst.msk [vmem:[%s11] sm:$0xff] %vm2164, %v2161
  %2166 = vst.msk [vmem:[%s11 + $0x8] sm:$0xff] %vm2164, %v2163
  // Predicated region
  $region46: #{lstm_forward.1} parent=0 // pred_check
    _
  $region47: #{lstm_forward.1} parent=0 // pred_check_branch
    %2168 = sbr.rel (0) target = $region49
  $region48: #{lstm_forward.1} parent=0 // pred_region
    _
  $region49: #{lstm_forward.1} parent=0 // pred_fallthru
    _
  // Predicated region
  $region50: #{lstm_forward.1} parent=0 // pred_check
    _
  $region51: #{lstm_forward.1} parent=0 // pred_check_branch
    %2170 = sbr.rel (0) target = $region53
  $region52: #{lstm_forward.1} parent=0 // pred_region
    _
  $region53: #{lstm_forward.1} parent=0 // pred_fallthru
    _

</llo_original>
